<compile_context>
chip_gen: v5e
topology: v5e:2x2
jax: 0.10.0
libtpu: 0.0.40
codegen_flags: <defaults>
</compile_context>

<pallas_src>
import functools

import jax
import jax.numpy as jnp
import numpy as np
from jax import lax
from jax.experimental import pallas as pl
from jax.experimental.pallas import tpu as pltpu


# ------------------------------- Pallas kernel -------------------------------


def _enhance_banded_kernel(x_ref, w_ref, b_ref, out_ref, *, H):
    """One grid step = one batch element.

    x_ref : (1, H+4, (W+4)*C) f32  -- input, zero-padded by 2 spatially, trailing
                                      dims flattened (lane index = w'*C + i).
    w_ref : (5, (W+4)*C, W*4*C) f32 -- banded weights, one slab per kernel row kh.
                                      column index = w*4*C + q*C + c
                                      (q = 2*dh + dw pixel-shuffle phase,
                                       c = final output channel; conv1_1 folded in).
    b_ref : (1, 1, W*4*C) f32       -- per-image bias (conv biases + GAP branch + b1),
                                      tiled over w.
    out   : (1, H, W*4*C) f32       -- lane-dense result, out[0, h, w*4*C + q*C + c].
    """
    # 5 accumulating dots; LHS is a sublane-shifted row window of the input,
    # result lands directly in the lane-dense output layout (no reshape/relayout).
    acc = jnp.dot(x_ref[0, pl.ds(0, H), :], w_ref[0],
                  preferred_element_type=jnp.float32)
    for kh in range(1, 5):
        acc = acc + jnp.dot(x_ref[0, pl.ds(kh, H), :], w_ref[kh],
                            preferred_element_type=jnp.float32)
    out_ref[0] = acc + b_ref[0]


# --------------------------------- wrapper -----------------------------------


def enhancefeature_forward(x_nchw, params):
    N, C, H, W = x_nchw.shape
    assert C % 8 == 0
    C8 = C // 8
    fourC = 4 * C
    Wp = W + 4
    hi = lax.Precision.HIGHEST

    W1_2d = params["W1"][:, :, 0, 0]                 # (C, C8)   [c, o]
    Wg_2d = params["Wg"][:, :, 0, 0]                 # (C8, C)   [o, i]

    # ---- fold conv3_3 (embedded in 5x5), conv5_5, conv1_1 and PixelShuffle ----
    W3p = jnp.pad(params["W3"], ((0, 0), (0, 0), (1, 1), (1, 1)))     # 3x3 -> 5x5
    Wsum = (params["W5"] + W3p).reshape(C8, 4, C, 5, 5)               # [o,q,i,kh,kw]
    # Wcomp[kh, kw, i, q, c] = sum_o W1[c,o] * Wsum[o,q,i,kh,kw]
    Wcomp = jnp.einsum('co,oqikl->kliqc', W1_2d, Wsum, precision=hi)  # (5,5,C,4,C)
    Wc2 = Wcomp.reshape(5, 5, C, fourC)                               # [kh,kw,i,q*C+c]

    # ---- banded (Toeplitz) weights: one slab per kh, zero outside the band ----
    Wband = jnp.zeros((5, Wp * C, W * fourC), jnp.float32)
    for kw in range(5):
        for w in range(W):
            Wband = Wband.at[:, (w + kw) * C:(w + kw + 1) * C,
                             w * fourC:(w + 1) * fourC].set(Wc2[:, kw])

    # ---- per-image bias: conv biases + global-average-pool branch + b1 --------
    b35 = (params["b3"] + params["b5"]).reshape(C8, 4)                # [o, q]
    bias_q = jnp.einsum('co,oq->qc', W1_2d, b35, precision=hi)        # (4, C)
    gmean = jnp.mean(x_nchw, axis=(2, 3))                             # (N, C)
    gap = jnp.einsum('ni,oi->no', gmean, Wg_2d, precision=hi) + params["bg"]  # (N,C8)
    bias_img = jnp.einsum('no,co->nc', gap, W1_2d, precision=hi)      # (N, C)
    bias = bias_q[None] + bias_img[:, None, :] + params["b1"][None, None, :]  # (N,4,C)
    bias = jnp.tile(bias.reshape(N, 1, fourC), (1, 1, W)).astype(jnp.float32)
    # -> (N, 1, W*4*C), lane index w*4*C + q*C + c

    # ---- input: NCHW -> NHWC, zero-pad by 2, flatten trailing dims ------------
    x = jnp.transpose(x_nchw, (0, 2, 3, 1))
    x_pad = jnp.pad(x, ((0, 0), (2, 2), (2, 2), (0, 0)))
    x_flat = x_pad.reshape(N, H + 4, Wp * C).astype(jnp.float32)

    kern = functools.partial(_enhance_banded_kernel, H=H)
    out_flat = pl.pallas_call(
        kern,
        grid=(N,),
        in_specs=[
            pl.BlockSpec((1, H + 4, Wp * C), lambda n: (n, 0, 0)),
            pl.BlockSpec((5, Wp * C, W * fourC), lambda n: (0, 0, 0)),
            pl.BlockSpec((1, 1, W * fourC), lambda n: (n, 0, 0)),
        ],
        out_specs=pl.BlockSpec((1, H, W * fourC), lambda n: (n, 0, 0)),
        out_shape=jax.ShapeDtypeStruct((N, H, W * fourC), jnp.float32),
        compiler_params=pltpu.CompilerParams(
            dimension_semantics=("parallel",),   # batch axis -> 2 TCs on v7x
            # footprint here is ~4 MiB; 32 MiB is safe on v5e/v6e/v7x alike
            vmem_limit_bytes=32 * 1024 * 1024),
    )(x_flat, Wband, bias)

    # ---- pixel-shuffle unfold + NHWC -> NCHW as one cheap layout pass ---------
    out = out_flat.reshape(N, H, W, 2, 2, C)        # [n, h, w, dh, dw, c]
    out = jnp.transpose(out, (0, 5, 1, 3, 2, 4))    # [n, c, h, dh, w, dw]
    return out.reshape(N, C, 2 * H, 2 * W)


# ----------------------------- pure-JAX reference ----------------------------


def _pixel_shuffle_nchw(y, r):
    N, CH, H, W = y.shape
    C = CH // (r * r)
    y = y.reshape(N, C, r, r, H, W)
    y = jnp.transpose(y, (0, 1, 4, 2, 5, 3))
    return y.reshape(N, C, H * r, W * r)


def ref_forward(x, p):
    dn = ("NCHW", "OIHW", "NCHW")
    hi = lax.Precision.HIGHEST
    y3 = lax.conv_general_dilated(x, p["W3"], (1, 1), [(1, 1), (1, 1)],
                                  dimension_numbers=dn,
                                  precision=hi) + p["b3"][None, :, None, None]
    y5 = lax.conv_general_dilated(x, p["W5"], (1, 1), [(2, 2), (2, 2)],
                                  dimension_numbers=dn,
                                  precision=hi) + p["b5"][None, :, None, None]
    x1 = _pixel_shuffle_nchw(y3, 2)
    x2 = _pixel_shuffle_nchw(y5, 2)
    g = jnp.mean(x, axis=(2, 3), keepdims=True)
    x3 = lax.conv_general_dilated(g, p["Wg"], (1, 1), [(0, 0), (0, 0)],
                                  dimension_numbers=dn,
                                  precision=hi) + p["bg"][None, :, None, None]
    out = x1 + x2 + x3
    out = lax.conv_general_dilated(out, p["W1"], (1, 1), [(0, 0), (0, 0)],
                                   dimension_numbers=dn,
                                   precision=hi) + p["b1"][None, :, None, None]
    return out


# ------------------------------------ main -----------------------------------


if __name__ == "__main__":
    N, C, H, W = 2, 16, 8, 8                        # in_channel = 16
    key = jax.random.PRNGKey(0)
    ks = jax.random.split(key, 10)
    x = jax.random.normal(ks[0], (N, C, H, W), jnp.float32)
    params = {
        "W3": 0.1 * jax.random.normal(ks[1], (C // 2, C, 3, 3), jnp.float32),
        "b3": 0.1 * jax.random.normal(ks[2], (C // 2,), jnp.float32),
        "W5": 0.1 * jax.random.normal(ks[3], (C // 2, C, 5, 5), jnp.float32),
        "b5": 0.1 * jax.random.normal(ks[4], (C // 2,), jnp.float32),
        "Wg": 0.1 * jax.random.normal(ks[5], (C // 8, C, 1, 1), jnp.float32),
        "bg": 0.1 * jax.random.normal(ks[6], (C // 8,), jnp.float32),
        "W1": 0.1 * jax.random.normal(ks[7], (C, C // 8, 1, 1), jnp.float32),
        "b1": 0.1 * jax.random.normal(ks[8], (C,), jnp.float32),
    }

    out = enhancefeature_forward(x, params)
    out = jax.block_until_ready(out)
    assert out.shape == (N, C, 2 * H, 2 * W)

    ref = jax.block_until_ready(ref_forward(x, params))
    # Full f32 pipeline (composed weights vs. sequential convs) -> tight tolerance.
    np.testing.assert_allclose(np.asarray(out), np.asarray(ref),
                               rtol=5e-3, atol=5e-3)
    print("KERNEL_OK")
</pallas_src>

<mosaic_0001>
module attributes {stable_mosaic.version = 11 : i64} {
  func.func @_enhance_banded_kernel(%arg0: i32, %arg1: memref<1x12x192xf32, #tpu.memory_space<vmem>>, %arg2: memref<5x192x512xf32, #tpu.memory_space<vmem>>, %arg3: memref<1x1x512xf32, #tpu.memory_space<vmem>>, %arg4: memref<1x8x512xf32, #tpu.memory_space<vmem>>) attributes {dimension_semantics = [#tpu.dimension_semantics<parallel>], iteration_bounds = array<i64: 2>, scalar_prefetch = 0 : i64, scratch_operands = 0 : i64, tpu.core_type = #tpu.core_type<tc>, window_params = [{transform_indices = @transform_0, window_bounds = array<i64: 1, 12, 192>}, {pipeline_mode = #tpu.pipeline_mode<synchronous>, transform_indices = @transform_1, window_bounds = array<i64: 5, 192, 512>}, {transform_indices = @transform_2, window_bounds = array<i64: 1, 1, 512>}, {transform_indices = @transform_3, window_bounds = array<i64: 1, 8, 512>}]} {
    %c0 = arith.constant 0 : index
    %c0_0 = arith.constant 0 : index
    %c0_1 = arith.constant 0 : index
    %0 = vector.load %arg1[%c0, %c0_0, %c0_1] : memref<1x12x192xf32, #tpu.memory_space<vmem>>, vector<1x8x192xf32>
    %1 = vector.shape_cast %0 : vector<1x8x192xf32> to vector<8x192xf32>
    %c0_2 = arith.constant 0 : index
    %c0_3 = arith.constant 0 : index
    %c0_4 = arith.constant 0 : index
    %2 = vector.load %arg2[%c0_2, %c0_3, %c0_4] : memref<5x192x512xf32, #tpu.memory_space<vmem>>, vector<1x192x512xf32>
    %3 = vector.shape_cast %2 : vector<1x192x512xf32> to vector<192x512xf32>
    %cst = arith.constant dense<0.000000e+00> : vector<8x512xf32>
    %4 = tpu.matmul %1, %3, %cst {dimension_numbers = #tpu.dot_dimension_numbers<[1], [0], [0], [1], [0, 0, 1, 1], [], []>} : vector<8x192xf32>, vector<192x512xf32>, vector<8x512xf32> -> vector<8x512xf32>
    %c0_5 = arith.constant 0 : index
    %c1 = arith.constant 1 : index
    %c0_6 = arith.constant 0 : index
    %5 = vector.load %arg1[%c0_5, %c1, %c0_6] : memref<1x12x192xf32, #tpu.memory_space<vmem>>, vector<1x8x192xf32>
    %6 = vector.shape_cast %5 : vector<1x8x192xf32> to vector<8x192xf32>
    %c1_7 = arith.constant 1 : index
    %c0_8 = arith.constant 0 : index
    %c0_9 = arith.constant 0 : index
    %7 = vector.load %arg2[%c1_7, %c0_8, %c0_9] : memref<5x192x512xf32, #tpu.memory_space<vmem>>, vector<1x192x512xf32>
    %8 = vector.shape_cast %7 : vector<1x192x512xf32> to vector<192x512xf32>
    %cst_10 = arith.constant dense<0.000000e+00> : vector<8x512xf32>
    %9 = tpu.matmul %6, %8, %cst_10 {dimension_numbers = #tpu.dot_dimension_numbers<[1], [0], [0], [1], [0, 0, 1, 1], [], []>} : vector<8x192xf32>, vector<192x512xf32>, vector<8x512xf32> -> vector<8x512xf32>
    %10 = arith.addf %4, %9 : vector<8x512xf32>
    %c0_11 = arith.constant 0 : index
    %c2 = arith.constant 2 : index
    %c0_12 = arith.constant 0 : index
    %11 = vector.load %arg1[%c0_11, %c2, %c0_12] : memref<1x12x192xf32, #tpu.memory_space<vmem>>, vector<1x8x192xf32>
    %12 = vector.shape_cast %11 : vector<1x8x192xf32> to vector<8x192xf32>
    %c2_13 = arith.constant 2 : index
    %c0_14 = arith.constant 0 : index
    %c0_15 = arith.constant 0 : index
    %13 = vector.load %arg2[%c2_13, %c0_14, %c0_15] : memref<5x192x512xf32, #tpu.memory_space<vmem>>, vector<1x192x512xf32>
    %14 = vector.shape_cast %13 : vector<1x192x512xf32> to vector<192x512xf32>
    %cst_16 = arith.constant dense<0.000000e+00> : vector<8x512xf32>
    %15 = tpu.matmul %12, %14, %cst_16 {dimension_numbers = #tpu.dot_dimension_numbers<[1], [0], [0], [1], [0, 0, 1, 1], [], []>} : vector<8x192xf32>, vector<192x512xf32>, vector<8x512xf32> -> vector<8x512xf32>
    %16 = arith.addf %10, %15 : vector<8x512xf32>
    %c0_17 = arith.constant 0 : index
    %c3 = arith.constant 3 : index
    %c0_18 = arith.constant 0 : index
    %17 = vector.load %arg1[%c0_17, %c3, %c0_18] : memref<1x12x192xf32, #tpu.memory_space<vmem>>, vector<1x8x192xf32>
    %18 = vector.shape_cast %17 : vector<1x8x192xf32> to vector<8x192xf32>
    %c3_19 = arith.constant 3 : index
    %c0_20 = arith.constant 0 : index
    %c0_21 = arith.constant 0 : index
    %19 = vector.load %arg2[%c3_19, %c0_20, %c0_21] : memref<5x192x512xf32, #tpu.memory_space<vmem>>, vector<1x192x512xf32>
    %20 = vector.shape_cast %19 : vector<1x192x512xf32> to vector<192x512xf32>
    %cst_22 = arith.constant dense<0.000000e+00> : vector<8x512xf32>
    %21 = tpu.matmul %18, %20, %cst_22 {dimension_numbers = #tpu.dot_dimension_numbers<[1], [0], [0], [1], [0, 0, 1, 1], [], []>} : vector<8x192xf32>, vector<192x512xf32>, vector<8x512xf32> -> vector<8x512xf32>
    %22 = arith.addf %16, %21 : vector<8x512xf32>
    %c0_23 = arith.constant 0 : index
    %c4 = arith.constant 4 : index
    %c0_24 = arith.constant 0 : index
    %23 = vector.load %arg1[%c0_23, %c4, %c0_24] : memref<1x12x192xf32, #tpu.memory_space<vmem>>, vector<1x8x192xf32>
    %24 = vector.shape_cast %23 : vector<1x8x192xf32> to vector<8x192xf32>
    %c4_25 = arith.constant 4 : index
    %c0_26 = arith.constant 0 : index
    %c0_27 = arith.constant 0 : index
    %25 = vector.load %arg2[%c4_25, %c0_26, %c0_27] : memref<5x192x512xf32, #tpu.memory_space<vmem>>, vector<1x192x512xf32>
    %26 = vector.shape_cast %25 : vector<1x192x512xf32> to vector<192x512xf32>
    %cst_28 = arith.constant dense<0.000000e+00> : vector<8x512xf32>
    %27 = tpu.matmul %24, %26, %cst_28 {dimension_numbers = #tpu.dot_dimension_numbers<[1], [0], [0], [1], [0, 0, 1, 1], [], []>} : vector<8x192xf32>, vector<192x512xf32>, vector<8x512xf32> -> vector<8x512xf32>
    %28 = arith.addf %22, %27 : vector<8x512xf32>
    %c0_29 = arith.constant 0 : index
    %c0_30 = arith.constant 0 : index
    %c0_31 = arith.constant 0 : index
    %29 = vector.load %arg3[%c0_29, %c0_30, %c0_31] : memref<1x1x512xf32, #tpu.memory_space<vmem>>, vector<1x1x512xf32>
    %30 = vector.shape_cast %29 : vector<1x1x512xf32> to vector<1x512xf32>
    %31 = vector.broadcast %30 : vector<1x512xf32> to vector<8x512xf32>
    %32 = arith.addf %28, %31 : vector<8x512xf32>
    %c0_32 = arith.constant 0 : index
    %c0_33 = arith.constant 0 : index
    %c0_34 = arith.constant 0 : index
    %33 = vector.load %arg4[%c0_32, %c0_33, %c0_34] : memref<1x8x512xf32, #tpu.memory_space<vmem>>, vector<1x8x512xf32>
    %34 = vector.shape_cast %33 : vector<1x8x512xf32> to vector<8x512xf32>
    %35 = vector.shape_cast %32 : vector<8x512xf32> to vector<1x8x512xf32>
    tpu.vector_store %arg4[%c0_32, %c0_33, %c0_34], %35 {strides = array<i32>} : memref<1x8x512xf32, #tpu.memory_space<vmem>>, vector<1x8x512xf32>,
    return
  }
  func.func @transform_0(%arg0: i32) -> (i32, i32, i32) {
    %c0_i32 = arith.constant 0 : i32
    %c0_i32_0 = arith.constant 0 : i32
    %c0_i32_1 = arith.constant 0 : i32
    return %arg0, %c0_i32, %c0_i32_0 : i32, i32, i32
  }
  func.func @transform_1(%arg0: i32) -> (i32, i32, i32) {
    %c0_i32 = arith.constant 0 : i32
    %c0_i32_0 = arith.constant 0 : i32
    %c0_i32_1 = arith.constant 0 : i32
    %c0_i32_2 = arith.constant 0 : i32
    return %c0_i32, %c0_i32_0, %c0_i32_1 : i32, i32, i32
  }
  func.func @transform_2(%arg0: i32) -> (i32, i32, i32) {
    %c0_i32 = arith.constant 0 : i32
    %c0_i32_0 = arith.constant 0 : i32
    %c0_i32_1 = arith.constant 0 : i32
    return %arg0, %c0_i32, %c0_i32_0 : i32, i32, i32
  }
  func.func @transform_3(%arg0: i32) -> (i32, i32, i32) {
    %c0_i32 = arith.constant 0 : i32
    %c0_i32_0 = arith.constant 0 : i32
    %c0_i32_1 = arith.constant 0 : i32
    return %arg0, %c0_i32, %c0_i32_0 : i32, i32, i32
  }
}

</mosaic_0001>

<llo_original>
// kernel: tpu_custom_call.1
$region0: #{tpu_custom_call.1}
  #allocation0 [shape = 'u32[]', space=smem, size = 0x4, offset = 0x4, fixed_abs, tag = 'smem constant byte address 0x4 - core index']
  #allocation1 [shape = 'u32[72,128]{1,0:T(1,128)}', space=vmem, size = 0x9000, scoped, tag = 'internal scratch']
  %s0 = inlined_call_operand.vmem [shape: f32[2,12,192], index: 0, kind: input, shape index: {}]
  %s1 = inlined_call_operand.hbm [shape: f32[5,192,512], index: 1, kind: input, shape index: {}]
  %s2 = inlined_call_operand.hbm [shape: f32[2,1,512], index: 2, kind: input, shape index: {}]
  %s3 = inlined_call_operand.hbm [shape: f32[2,8,512], index: 3, kind: output, shape index: {}]
  %s4 = sld [smem:[#allocation0]]
  $region53: #{tpu_custom_call.1} parent=0
    _
  %s6 = ssub.s32 1, %s4
  %s7 = scalar_select 0, %s6, %s4
  $region1: #{tpu_custom_call.1} parent=0
    #allocation2 [shape = 'u8[1966080]{0}', space=vmem, size = 0x1e0000, scoped, tag = 'input window, operand 1, single buffered']
    #allocation3 [shape = 's32[2]{0}', space=sflag, size = 0x8, scoped, tag = 'scoped memory for tpu_custom_call.1']
    #allocation4 [shape = 's32[2]{0}', space=sflag, size = 0x8, scoped, tag = 'scoped memory for tpu_custom_call.1']
    #allocation5 [shape = 'u8[4096]{0}', space=vmem, size = 0x1000, scoped, tag = 'input window, operand 2']
    #allocation6 [shape = 's32[2]{0}', space=sflag, size = 0x8, scoped, tag = 'scoped memory for tpu_custom_call.1']
    #allocation7 [shape = 'u8[32768]{0}', space=vmem, size = 0x8000, scoped, tag = 'output window, operand 0']
    %8 = vsyncpa [#allocation3], 0
    %9 = vsyncpa [#allocation6], 0
    %s10 = scalar_lea.sflag [#allocation6], 1
    %11 = vsyncpa %s10, 0
    %12 = vsyncpa [#allocation4], 0
    %s13 = scalar_lea.sflag [#allocation4], 1
    %14 = vsyncpa %s13, 0
    loop: start=0, step=1, limit=4
    $region2: #{tpu_custom_call.1} parent=1 // loop_pre_header
      _
    $region3: #{tpu_custom_call.1} parent=1 // loop_header
      %s16 = sphi 0, %s20
      %p17 = scmp.ge.s32.totalorder %s16, 4
      %s26 = sphi 0, %s28
      %s29 = sphi 0, %s26
      %s30 = sphi 0, %s29
      %s46 = sphi 0, %s30
      %s50 = sphi 0, %s50
      %s52 = sphi 0, %s50
      %s53 = sphi 0, %s52
      %s67 = sphi 0, %s53
      %s73 = sphi 0, %s75
      %s76 = sphi 0, %s73
      %s77 = sphi 0, %s76
      %s93 = sphi 0, %s77
      %s99 = sphi 0, %s101
      %s102 = sphi 0, %s99
      %s103 = sphi 0, %s102
      %s119 = sphi 0, %s103
    $region4: #{tpu_custom_call.1} parent=1 // loop_header_branch
      %19 = sbr.rel (%p17) target = $region8
    $region5: #{tpu_custom_call.1} parent=1 // loop_body
      %s21 = ssub.s32 %s16, 1
      %s22 = ssub.s32 %s16, 2
      %s23 = sadd.s32 %s16, 1
      %s24 = ssub.s32 %s16, %s23
      %p25 = scmp.eq.s32.totalorder %s24, 0
      %s27 = sadd.s32 %s26, 1
      %s28 = scalar_select %p25, %s26, %s27
      %p31 = pneg %p25
      %p32 = scmp.eq.s32.totalorder %s16, 1
      %p33 = por %p31, %p32
      %p34 = scmp.ne.s32.totalorder %s26, %s29
      %p35 = scmp.eq.s32.totalorder %s16, 0
      %p36 = por %p34, %p35
      %p37 = scmp.ne.s32.totalorder %s26, %s29
      %p38 = scmp.eq.s32.totalorder %s21, 1
      %p39 = por %p37, %p38
      %p40 = scmp.ne.s32.totalorder %s29, %s30
      %p41 = scmp.eq.s32.totalorder %s21, 0
      %p42 = por %p40, %p41
      %p43 = scmp.ne.s32.totalorder %s29, %s30
      %p44 = scmp.eq.s32.totalorder %s22, 1
      %p45 = por %p43, %p44
      %p47 = scmp.ne.s32.totalorder %s30, %s46
      %p48 = scmp.eq.s32.totalorder %s22, 0
      %p49 = por %p47, %p48
      %s51 = sadd.s32 %s50, 1
      %p54 = scmp.eq.s32.totalorder %s16, 1
      %p55 = scmp.ne.s32.totalorder %s50, %s52
      %p56 = scmp.eq.s32.totalorder %s16, 0
      %p57 = por %p55, %p56
      %p58 = scmp.ne.s32.totalorder %s50, %s52
      %p59 = scmp.eq.s32.totalorder %s21, 1
      %p60 = por %p58, %p59
      %p61 = scmp.ne.s32.totalorder %s52, %s53
      %p62 = scmp.eq.s32.totalorder %s21, 0
      %p63 = por %p61, %p62
      %p64 = scmp.ne.s32.totalorder %s52, %s53
      %p65 = scmp.eq.s32.totalorder %s22, 1
      %p66 = por %p64, %p65
      %p68 = scmp.ne.s32.totalorder %s53, %s67
      %p69 = scmp.eq.s32.totalorder %s22, 0
      %p70 = por %p68, %p69
      %s71 = ssub.s32 %s16, %s23
      %p72 = scmp.eq.s32.totalorder %s71, 0
      %s74 = sadd.s32 %s73, 1
      %s75 = scalar_select %p72, %s73, %s74
      %p78 = pneg %p72
      %p79 = scmp.eq.s32.totalorder %s16, 1
      %p80 = por %p78, %p79
      %p81 = scmp.ne.s32.totalorder %s73, %s76
      %p82 = scmp.eq.s32.totalorder %s16, 0
      %p83 = por %p81, %p82
      %p84 = scmp.ne.s32.totalorder %s73, %s76
      %p85 = scmp.eq.s32.totalorder %s21, 1
      %p86 = por %p84, %p85
      %p87 = scmp.ne.s32.totalorder %s76, %s77
      %p88 = scmp.eq.s32.totalorder %s21, 0
      %p89 = por %p87, %p88
      %p90 = scmp.ne.s32.totalorder %s76, %s77
      %p91 = scmp.eq.s32.totalorder %s22, 1
      %p92 = por %p90, %p91
      %p94 = scmp.ne.s32.totalorder %s77, %s93
      %p95 = scmp.eq.s32.totalorder %s22, 0
      %p96 = por %p94, %p95
      %s97 = ssub.s32 %s16, %s23
      %p98 = scmp.eq.s32.totalorder %s97, 0
      %s100 = sadd.s32 %s99, 1
      %s101 = scalar_select %p98, %s99, %s100
      %p104 = pneg %p98
      %p105 = scmp.eq.s32.totalorder %s16, 1
      %p106 = por %p104, %p105
      %p107 = scmp.ne.s32.totalorder %s99, %s102
      %p108 = scmp.eq.s32.totalorder %s16, 0
      %p109 = por %p107, %p108
      %p110 = scmp.ne.s32.totalorder %s99, %s102
      %p111 = scmp.eq.s32.totalorder %s21, 1
      %p112 = por %p110, %p111
      %p113 = scmp.ne.s32.totalorder %s102, %s103
      %p114 = scmp.eq.s32.totalorder %s21, 0
      %p115 = por %p113, %p114
      %p116 = scmp.ne.s32.totalorder %s102, %s103
      %p117 = scmp.eq.s32.totalorder %s22, 1
      %p118 = por %p116, %p117
      %p120 = scmp.ne.s32.totalorder %s103, %s119
      %p121 = scmp.eq.s32.totalorder %s22, 0
      %p122 = por %p120, %p121
      %p123 = scmp.le.s32.totalorder 1, %s16
      %p124 = scmp.lt.s32.totalorder %s16, 3
      %p125 = pnand %p123, %p124
      %p126 = pneg %p125
      // Predicated region
      $region9: #{tpu_custom_call.1} parent=5 // pred_check
        _
      $region10: #{tpu_custom_call.1} parent=5 // pred_check_branch
        %128 = sbr.rel (%p125) target = $region12
      $region11: #{tpu_custom_call.1} parent=5 // pred_region
        %s129 = ssub.s32 %s16, 1
        // Predicated region
        $region13: #{tpu_custom_call.1} parent=11 // pred_check
          %p130 = pneg %p63
        $region14: #{tpu_custom_call.1} parent=11 // pred_check_branch
          %132 = sbr.rel (%p130) target = $region16
        $region15: #{tpu_custom_call.1} parent=11 // pred_region
          %134 = vsyncadd [#allocation3], 0
          %s135 = sshll.u32 %s1, 4
          %s136 = int_to_ptr.hbm [resolvable:$true] %s135
          %s137 = sshll.u32 [#allocation2], 4
          %s138 = int_to_ptr.vmem [resolvable:$true] %s137
          %143 = dma.hbm_to_vmem [thread:$0]  %s136, 61440, %s138, [#allocation3], 512, 512, 32
        $region16: #{tpu_custom_call.1} parent=11 // pred_fallthru
          _
      $region12: #{tpu_custom_call.1} parent=5 // pred_fallthru
        _
      %p144 = scmp.lt.s32.totalorder %s16, 2
      // Predicated region
      $region17: #{tpu_custom_call.1} parent=5 // pred_check
        %p145 = pneg %p144
      $region18: #{tpu_custom_call.1} parent=5 // pred_check_branch
        %147 = sbr.rel (%p145) target = $region20
      $region19: #{tpu_custom_call.1} parent=5 // pred_region
        // Predicated region
        $region21: #{tpu_custom_call.1} parent=19 // pred_check
          %p148 = pneg %p36
        $region22: #{tpu_custom_call.1} parent=19 // pred_check_branch
          %150 = sbr.rel (%p148) target = $region24
        $region23: #{tpu_custom_call.1} parent=19 // pred_region
          %p151 = scmp.lt.s32.totalorder %s16, 1
          %s152 = scalar_select %p151, %s16, 1
          %s153 = smul.addr %s152, 4
          %s154 = smul.addr %s153, 8
          %s155 = scalar_lea.vmem %s0, %s154
        $region24: #{tpu_custom_call.1} parent=19 // pred_fallthru
          _
        // Predicated region
        $region25: #{tpu_custom_call.1} parent=19 // pred_check
          %p156 = pneg %p83
        $region26: #{tpu_custom_call.1} parent=19 // pred_check_branch
          %158 = sbr.rel (%p156) target = $region28
        $region27: #{tpu_custom_call.1} parent=19 // pred_region
          %s159 = sand.u32 %s73, 1
          %s160 = scalar_lea.sflag [#allocation6], %s159
          %s161 = sand.u32 %s73, 1
          %s162 = smul.addr %s161, 4
          %s163 = scalar_lea.vmem [#allocation5], %s162
          %165 = vsyncadd %s160, 0
          %s166 = smul.addr %s16, 4
          %s167 = scalar_lea.hbm %s2, %s166
          %s169 = sshll.u32 %s167, 4
          %s170 = int_to_ptr.hbm [resolvable:$true] %s169
          %s171 = sshll.u32 %s163, 4
          %s172 = int_to_ptr.vmem [resolvable:$true] %s171
          %174 = dma.hbm_to_vmem [thread:$0]  %s170, 64, %s172, %s160
        $region28: #{tpu_custom_call.1} parent=19 // pred_fallthru
          _
      $region20: #{tpu_custom_call.1} parent=5 // pred_fallthru
        _
      %p175 = scmp.le.s32.totalorder 1, %s16
      %p176 = scmp.lt.s32.totalorder %s16, 3
      %p177 = pnand %p175, %p176
      %p178 = pneg %p177
      // Predicated region
      $region29: #{tpu_custom_call.1} parent=5 // pred_check
        _
      $region30: #{tpu_custom_call.1} parent=5 // pred_check_branch
        %180 = sbr.rel (%p177) target = $region32
      $region31: #{tpu_custom_call.1} parent=5 // pred_region
        %s181 = ssub.s32 %s16, 1
        // Predicated region
        $region33: #{tpu_custom_call.1} parent=31 // pred_check
          %p182 = pneg %p63
        $region34: #{tpu_custom_call.1} parent=31 // pred_check_branch
          %184 = sbr.rel (%p182) target = $region36
        $region35: #{tpu_custom_call.1} parent=31 // pred_region
          %186 = dma.done [#allocation3], 61440
        $region36: #{tpu_custom_call.1} parent=31 // pred_fallthru
          _
        %s187 = sand.u32 %s76, 1
        %s188 = scalar_lea.sflag [#allocation6], %s187
        %s189 = sand.u32 %s76, 1
        %s190 = smul.addr %s189, 4
        %s191 = scalar_lea.vmem [#allocation5], %s190
        // Predicated region
        $region37: #{tpu_custom_call.1} parent=31 // pred_check
          %p192 = pneg %p89
        $region38: #{tpu_custom_call.1} parent=31 // pred_check_branch
          %194 = sbr.rel (%p192) target = $region40
        $region39: #{tpu_custom_call.1} parent=31 // pred_region
          %196 = dma.done %s188, 64
        $region40: #{tpu_custom_call.1} parent=31 // pred_fallthru
          _
        %p197 = scmp.lt.s32.totalorder %s21, 1
        %s198 = scalar_select %p197, %s21, 1
        %s199 = smul.addr %s198, 4
        %s200 = smul.addr %s199, 8
        %s201 = scalar_lea.vmem %s0, %s200
        %p202 = pneg %p42
        %p203 = pneg %p39
        %p204 = pneg %p63
        %p205 = pneg %p60
        %s206 = sand.u32 %s76, 1
        %s207 = scalar_lea.sflag [#allocation6], %s206
        %s208 = sand.u32 %s76, 1
        %s209 = smul.addr %s208, 4
        %s210 = scalar_lea.vmem [#allocation5], %s209
        %p211 = pneg %p89
        %p212 = pneg %p86
        %p213 = pneg %p115
        %p214 = pneg %p112
        %s215 = sand.u32 %s102, 1
        %s216 = scalar_lea.sflag [#allocation4], %s215
        %s217 = sand.u32 %s102, 1
        %s218 = smul.addr %s217, 32
        %s219 = scalar_lea.vmem [#allocation7], %s218
        %p220 = scmp.lt.s32.totalorder %s21, 1
        %s221 = scalar_select %p220, %s21, 1
        %s222 = smul.addr %s221, 4
        %s223 = smul.addr %s222, 8
        %s224 = scalar_lea.vmem %s0, %s223
        %v225 = vld [vmem:[%s224] sm:$0xff]
        %v226 = vld [vmem:[%s224 + $0x8] sm:$0xff]
        %v227 = vld [vmem:[#allocation2] sm:$0xff]
        %v228 = vld [vmem:[#allocation2 + $0x8] sm:$0xff]
        %v229 = vld [vmem:[#allocation2 + $0x10] sm:$0xff]
        %v230 = vld [vmem:[#allocation2 + $0x18] sm:$0xff]
        %v231 = vld [vmem:[#allocation2 + $0x20] sm:$0xff]
        %v232 = vld [vmem:[#allocation2 + $0x28] sm:$0xff]
        %v233 = vld [vmem:[#allocation2 + $0x30] sm:$0xff]
        %v234 = vld [vmem:[#allocation2 + $0x38] sm:$0xff]
        %v235 = vld [vmem:[#allocation2 + $0x40] sm:$0xff]
        %v236 = vld [vmem:[#allocation2 + $0x48] sm:$0xff]
        %v237 = vld [vmem:[#allocation2 + $0x50] sm:$0xff]
        %v238 = vld [vmem:[#allocation2 + $0x58] sm:$0xff]
        %v239 = vld [vmem:[#allocation2 + $0x60] sm:$0xff]
        %v240 = vld [vmem:[#allocation2 + $0x68] sm:$0xff]
        %v241 = vld [vmem:[#allocation2 + $0x70] sm:$0xff]
        %v242 = vld [vmem:[#allocation2 + $0x78] sm:$0xff]
        %v243 = vld [vmem:[#allocation2 + $0x80] sm:$0xff]
        %v244 = vld [vmem:[#allocation2 + $0x88] sm:$0xff]
        %v245 = vld [vmem:[#allocation2 + $0x90] sm:$0xff]
        %v246 = vld [vmem:[#allocation2 + $0x98] sm:$0xff]
        %v247 = vld [vmem:[#allocation2 + $0xa0] sm:$0xff]
        %v248 = vld [vmem:[#allocation2 + $0xa8] sm:$0xff]
        %v249 = vld [vmem:[#allocation2 + $0xb0] sm:$0xff]
        %v250 = vld [vmem:[#allocation2 + $0xb8] sm:$0xff]
        %v251 = vld [vmem:[#allocation2 + $0xc0] sm:$0xff]
        %v252 = vld [vmem:[#allocation2 + $0xc8] sm:$0xff]
        %v253 = vld [vmem:[#allocation2 + $0xd0] sm:$0xff]
        %v254 = vld [vmem:[#allocation2 + $0xd8] sm:$0xff]
        %v255 = vld [vmem:[#allocation2 + $0xe0] sm:$0xff]
        %v256 = vld [vmem:[#allocation2 + $0xe8] sm:$0xff]
        %v257 = vld [vmem:[#allocation2 + $0xf0] sm:$0xff]
        %v258 = vld [vmem:[#allocation2 + $0xf8] sm:$0xff]
        %v259 = vld [vmem:[#allocation2 + $0x100] sm:$0xff]
        %v260 = vld [vmem:[#allocation2 + $0x108] sm:$0xff]
        %v261 = vld [vmem:[#allocation2 + $0x110] sm:$0xff]
        %v262 = vld [vmem:[#allocation2 + $0x118] sm:$0xff]
        %v263 = vld [vmem:[#allocation2 + $0x120] sm:$0xff]
        %v264 = vld [vmem:[#allocation2 + $0x128] sm:$0xff]
        %v265 = vld [vmem:[#allocation2 + $0x130] sm:$0xff]
        %v266 = vld [vmem:[#allocation2 + $0x138] sm:$0xff]
        %v267 = vld [vmem:[#allocation2 + $0x140] sm:$0xff]
        %v268 = vld [vmem:[#allocation2 + $0x148] sm:$0xff]
        %v269 = vld [vmem:[#allocation2 + $0x150] sm:$0xff]
        %v270 = vld [vmem:[#allocation2 + $0x158] sm:$0xff]
        %v271 = vld [vmem:[#allocation2 + $0x160] sm:$0xff]
        %v272 = vld [vmem:[#allocation2 + $0x168] sm:$0xff]
        %v273 = vld [vmem:[#allocation2 + $0x170] sm:$0xff]
        %v274 = vld [vmem:[#allocation2 + $0x178] sm:$0xff]
        %v275 = vld [vmem:[#allocation2 + $0x180] sm:$0xff]
        %v276 = vld [vmem:[#allocation2 + $0x188] sm:$0xff]
        %v277 = vld [vmem:[#allocation2 + $0x190] sm:$0xff]
        %v278 = vld [vmem:[#allocation2 + $0x198] sm:$0xff]
        %v279 = vld [vmem:[#allocation2 + $0x1a0] sm:$0xff]
        %v280 = vld [vmem:[#allocation2 + $0x1a8] sm:$0xff]
        %v281 = vld [vmem:[#allocation2 + $0x1b0] sm:$0xff]
        %v282 = vld [vmem:[#allocation2 + $0x1b8] sm:$0xff]
        %v283 = vld [vmem:[#allocation2 + $0x1c0] sm:$0xff]
        %v284 = vld [vmem:[#allocation2 + $0x1c8] sm:$0xff]
        %v285 = vld [vmem:[#allocation2 + $0x1d0] sm:$0xff]
        %v286 = vld [vmem:[#allocation2 + $0x1d8] sm:$0xff]
        %v287 = vld [vmem:[#allocation2 + $0x1e0] sm:$0xff]
        %v288 = vld [vmem:[#allocation2 + $0x1e8] sm:$0xff]
        %v289 = vld [vmem:[#allocation2 + $0x1f0] sm:$0xff]
        %v290 = vld [vmem:[#allocation2 + $0x1f8] sm:$0xff]
        %v291 = vld [vmem:[#allocation2 + $0x200] sm:$0xff]
        %v292 = vld [vmem:[#allocation2 + $0x208] sm:$0xff]
        %v293 = vld [vmem:[#allocation2 + $0x210] sm:$0xff]
        %v294 = vld [vmem:[#allocation2 + $0x218] sm:$0xff]
        %v295 = vld [vmem:[#allocation2 + $0x220] sm:$0xff]
        %v296 = vld [vmem:[#allocation2 + $0x228] sm:$0xff]
        %v297 = vld [vmem:[#allocation2 + $0x230] sm:$0xff]
        %v298 = vld [vmem:[#allocation2 + $0x238] sm:$0xff]
        %v299 = vld [vmem:[#allocation2 + $0x240] sm:$0xff]
        %v300 = vld [vmem:[#allocation2 + $0x248] sm:$0xff]
        %v301 = vld [vmem:[#allocation2 + $0x250] sm:$0xff]
        %v302 = vld [vmem:[#allocation2 + $0x258] sm:$0xff]
        %v303 = vld [vmem:[#allocation2 + $0x260] sm:$0xff]
        %v304 = vld [vmem:[#allocation2 + $0x268] sm:$0xff]
        %v305 = vld [vmem:[#allocation2 + $0x270] sm:$0xff]
        %v306 = vld [vmem:[#allocation2 + $0x278] sm:$0xff]
        %v307 = vld [vmem:[#allocation2 + $0x280] sm:$0xff]
        %v308 = vld [vmem:[#allocation2 + $0x288] sm:$0xff]
        %v309 = vld [vmem:[#allocation2 + $0x290] sm:$0xff]
        %v310 = vld [vmem:[#allocation2 + $0x298] sm:$0xff]
        %v311 = vld [vmem:[#allocation2 + $0x2a0] sm:$0xff]
        %v312 = vld [vmem:[#allocation2 + $0x2a8] sm:$0xff]
        %v313 = vld [vmem:[#allocation2 + $0x2b0] sm:$0xff]
        %v314 = vld [vmem:[#allocation2 + $0x2b8] sm:$0xff]
        %v315 = vld [vmem:[#allocation2 + $0x2c0] sm:$0xff]
        %v316 = vld [vmem:[#allocation2 + $0x2c8] sm:$0xff]
        %v317 = vld [vmem:[#allocation2 + $0x2d0] sm:$0xff]
        %v318 = vld [vmem:[#allocation2 + $0x2d8] sm:$0xff]
        %v319 = vld [vmem:[#allocation2 + $0x2e0] sm:$0xff]
        %v320 = vld [vmem:[#allocation2 + $0x2e8] sm:$0xff]
        %v321 = vld [vmem:[#allocation2 + $0x2f0] sm:$0xff]
        %v322 = vld [vmem:[#allocation2 + $0x2f8] sm:$0xff]
        %v323 = vld [vmem:[%s224] sm:$0xfe]
        %v324 = vld [vmem:[%s224 + $0x8] sm:$0xfe]
        %v325 = vld [vmem:[%s224 + $0x10] sm:$0x1]
        %v326 = vld [vmem:[%s224 + $0x18] sm:$0x1]
        %s327 = scalar_lea.vmem [#allocation2], 768
        %v328 = vld [vmem:[%s327] sm:$0xff]
        %v329 = vld [vmem:[%s327 + $0x8] sm:$0xff]
        %v330 = vld [vmem:[%s327 + $0x10] sm:$0xff]
        %v331 = vld [vmem:[%s327 + $0x18] sm:$0xff]
        %v332 = vld [vmem:[%s327 + $0x20] sm:$0xff]
        %v333 = vld [vmem:[%s327 + $0x28] sm:$0xff]
        %v334 = vld [vmem:[%s327 + $0x30] sm:$0xff]
        %v335 = vld [vmem:[%s327 + $0x38] sm:$0xff]
        %v336 = vld [vmem:[%s327 + $0x40] sm:$0xff]
        %v337 = vld [vmem:[%s327 + $0x48] sm:$0xff]
        %v338 = vld [vmem:[%s327 + $0x50] sm:$0xff]
        %v339 = vld [vmem:[%s327 + $0x58] sm:$0xff]
        %v340 = vld [vmem:[%s327 + $0x60] sm:$0xff]
        %v341 = vld [vmem:[%s327 + $0x68] sm:$0xff]
        %v342 = vld [vmem:[%s327 + $0x70] sm:$0xff]
        %v343 = vld [vmem:[%s327 + $0x78] sm:$0xff]
        %v344 = vld [vmem:[%s327 + $0x80] sm:$0xff]
        %v345 = vld [vmem:[%s327 + $0x88] sm:$0xff]
        %v346 = vld [vmem:[%s327 + $0x90] sm:$0xff]
        %v347 = vld [vmem:[%s327 + $0x98] sm:$0xff]
        %v348 = vld [vmem:[%s327 + $0xa0] sm:$0xff]
        %v349 = vld [vmem:[%s327 + $0xa8] sm:$0xff]
        %v350 = vld [vmem:[%s327 + $0xb0] sm:$0xff]
        %v351 = vld [vmem:[%s327 + $0xb8] sm:$0xff]
        %v352 = vld [vmem:[%s327 + $0xc0] sm:$0xff]
        %v353 = vld [vmem:[%s327 + $0xc8] sm:$0xff]
        %v354 = vld [vmem:[%s327 + $0xd0] sm:$0xff]
        %v355 = vld [vmem:[%s327 + $0xd8] sm:$0xff]
        %v356 = vld [vmem:[%s327 + $0xe0] sm:$0xff]
        %v357 = vld [vmem:[%s327 + $0xe8] sm:$0xff]
        %v358 = vld [vmem:[%s327 + $0xf0] sm:$0xff]
        %v359 = vld [vmem:[%s327 + $0xf8] sm:$0xff]
        %v360 = vld [vmem:[%s327 + $0x100] sm:$0xff]
        %v361 = vld [vmem:[%s327 + $0x108] sm:$0xff]
        %v362 = vld [vmem:[%s327 + $0x110] sm:$0xff]
        %v363 = vld [vmem:[%s327 + $0x118] sm:$0xff]
        %v364 = vld [vmem:[%s327 + $0x120] sm:$0xff]
        %v365 = vld [vmem:[%s327 + $0x128] sm:$0xff]
        %v366 = vld [vmem:[%s327 + $0x130] sm:$0xff]
        %v367 = vld [vmem:[%s327 + $0x138] sm:$0xff]
        %v368 = vld [vmem:[%s327 + $0x140] sm:$0xff]
        %v369 = vld [vmem:[%s327 + $0x148] sm:$0xff]
        %v370 = vld [vmem:[%s327 + $0x150] sm:$0xff]
        %v371 = vld [vmem:[%s327 + $0x158] sm:$0xff]
        %v372 = vld [vmem:[%s327 + $0x160] sm:$0xff]
        %v373 = vld [vmem:[%s327 + $0x168] sm:$0xff]
        %v374 = vld [vmem:[%s327 + $0x170] sm:$0xff]
        %v375 = vld [vmem:[%s327 + $0x178] sm:$0xff]
        %v376 = vld [vmem:[%s327 + $0x180] sm:$0xff]
        %v377 = vld [vmem:[%s327 + $0x188] sm:$0xff]
        %v378 = vld [vmem:[%s327 + $0x190] sm:$0xff]
        %v379 = vld [vmem:[%s327 + $0x198] sm:$0xff]
        %v380 = vld [vmem:[%s327 + $0x1a0] sm:$0xff]
        %v381 = vld [vmem:[%s327 + $0x1a8] sm:$0xff]
        %v382 = vld [vmem:[%s327 + $0x1b0] sm:$0xff]
        %v383 = vld [vmem:[%s327 + $0x1b8] sm:$0xff]
        %v384 = vld [vmem:[%s327 + $0x1c0] sm:$0xff]
        %v385 = vld [vmem:[%s327 + $0x1c8] sm:$0xff]
        %v386 = vld [vmem:[%s327 + $0x1d0] sm:$0xff]
        %v387 = vld [vmem:[%s327 + $0x1d8] sm:$0xff]
        %v388 = vld [vmem:[%s327 + $0x1e0] sm:$0xff]
        %v389 = vld [vmem:[%s327 + $0x1e8] sm:$0xff]
        %v390 = vld [vmem:[%s327 + $0x1f0] sm:$0xff]
        %v391 = vld [vmem:[%s327 + $0x1f8] sm:$0xff]
        %v392 = vld [vmem:[%s327 + $0x200] sm:$0xff]
        %v393 = vld [vmem:[%s327 + $0x208] sm:$0xff]
        %v394 = vld [vmem:[%s327 + $0x210] sm:$0xff]
        %v395 = vld [vmem:[%s327 + $0x218] sm:$0xff]
        %v396 = vld [vmem:[%s327 + $0x220] sm:$0xff]
        %v397 = vld [vmem:[%s327 + $0x228] sm:$0xff]
        %v398 = vld [vmem:[%s327 + $0x230] sm:$0xff]
        %v399 = vld [vmem:[%s327 + $0x238] sm:$0xff]
        %v400 = vld [vmem:[%s327 + $0x240] sm:$0xff]
        %v401 = vld [vmem:[%s327 + $0x248] sm:$0xff]
        %v402 = vld [vmem:[%s327 + $0x250] sm:$0xff]
        %v403 = vld [vmem:[%s327 + $0x258] sm:$0xff]
        %v404 = vld [vmem:[%s327 + $0x260] sm:$0xff]
        %v405 = vld [vmem:[%s327 + $0x268] sm:$0xff]
        %v406 = vld [vmem:[%s327 + $0x270] sm:$0xff]
        %v407 = vld [vmem:[%s327 + $0x278] sm:$0xff]
        %v408 = vld [vmem:[%s327 + $0x280] sm:$0xff]
        %v409 = vld [vmem:[%s327 + $0x288] sm:$0xff]
        %v410 = vld [vmem:[%s327 + $0x290] sm:$0xff]
        %v411 = vld [vmem:[%s327 + $0x298] sm:$0xff]
        %v412 = vld [vmem:[%s327 + $0x2a0] sm:$0xff]
        %v413 = vld [vmem:[%s327 + $0x2a8] sm:$0xff]
        %v414 = vld [vmem:[%s327 + $0x2b0] sm:$0xff]
        %v415 = vld [vmem:[%s327 + $0x2b8] sm:$0xff]
        %v416 = vld [vmem:[%s327 + $0x2c0] sm:$0xff]
        %v417 = vld [vmem:[%s327 + $0x2c8] sm:$0xff]
        %v418 = vld [vmem:[%s327 + $0x2d0] sm:$0xff]
        %v419 = vld [vmem:[%s327 + $0x2d8] sm:$0xff]
        %v420 = vld [vmem:[%s327 + $0x2e0] sm:$0xff]
        %v421 = vld [vmem:[%s327 + $0x2e8] sm:$0xff]
        %v422 = vld [vmem:[%s327 + $0x2f0] sm:$0xff]
        %v423 = vld [vmem:[%s327 + $0x2f8] sm:$0xff]
        %vm428 = vcmask 1046528
        %v429 = vrot.slane %v323, 1
        %v430 = vrot.slane %v325, 1
        %v431 = vsel %vm428, %v429, %v430
        %v432 = vrot.slane %v324, 1
        %v433 = vrot.slane %v326, 1
        %v434 = vsel %vm428, %v432, %v433
        %vm436 = vcmask 523264
        %v437 = vsel %vm436, %v434, 0
        %439 = vmatpush.msra.mxu0 %v388
        %440 = vmatpush.msra.mxu0 %v384
        %441 = vmatpush.msra.mxu0 %v380
        %442 = vmatpush.msra.mxu0 %v376
        %443 = vmatpush.msra.mxu0 %v372
        %444 = vmatpush.msra.mxu0 %v368
        %445 = vmatpush.msra.mxu0 %v364
        %446 = vmatpush.msra.mxu0 %v360
        %447 = vmatpush.msra.mxu0 %v356
        %448 = vmatpush.msra.mxu0 %v352
        %449 = vmatpush.msra.mxu0 %v348
        %450 = vmatpush.msra.mxu0 %v344
        %451 = vmatpush.msra.mxu0 %v340
        %452 = vmatpush.msra.mxu0 %v336
        %453 = vmatpush.msra.mxu0 %v332
        %454 = vmatpush.msra.mxu0 %v328
        %455 = vmatmul.f32.gmra.mxu0 %v431
        %v456 = vpop.f32.mrf.mxu0
        %v457 = vadd.f32 0.0, %v456
        %458 = vdwg.mxu0
        %459 = vmatpush.msra.mxu0 0.0
        %460 = vmatpush.msra.mxu0 0.0
        %461 = vmatpush.msra.mxu0 0.0
        %462 = vmatpush.msra.mxu0 0.0
        %463 = vmatpush.msra.mxu0 0.0
        %464 = vmatpush.msra.mxu0 0.0
        %465 = vmatpush.msra.mxu0 0.0
        %466 = vmatpush.msra.mxu0 0.0
        %467 = vmatpush.msra.mxu0 %v420
        %468 = vmatpush.msra.mxu0 %v416
        %469 = vmatpush.msra.mxu0 %v412
        %470 = vmatpush.msra.mxu0 %v408
        %471 = vmatpush.msra.mxu0 %v404
        %472 = vmatpush.msra.mxu0 %v400
        %473 = vmatpush.msra.mxu0 %v396
        %474 = vmatpush.msra.mxu0 %v392
        %475 = vmatmul.f32.gmra.mxu0 %v437
        %v476 = vpop.f32.mrf.mxu0
        %v477 = vadd.f32 %v457, %v476
        %478 = vdwg.mxu0
        %479 = vmatpush.msra.mxu0 %v389
        %480 = vmatpush.msra.mxu0 %v385
        %481 = vmatpush.msra.mxu0 %v381
        %482 = vmatpush.msra.mxu0 %v377
        %483 = vmatpush.msra.mxu0 %v373
        %484 = vmatpush.msra.mxu0 %v369
        %485 = vmatpush.msra.mxu0 %v365
        %486 = vmatpush.msra.mxu0 %v361
        %487 = vmatpush.msra.mxu0 %v357
        %488 = vmatpush.msra.mxu0 %v353
        %489 = vmatpush.msra.mxu0 %v349
        %490 = vmatpush.msra.mxu0 %v345
        %491 = vmatpush.msra.mxu0 %v341
        %492 = vmatpush.msra.mxu0 %v337
        %493 = vmatpush.msra.mxu0 %v333
        %494 = vmatpush.msra.mxu0 %v329
        %495 = vmatmul.f32.gmra.mxu0 %v431
        %v496 = vpop.f32.mrf.mxu0
        %v497 = vadd.f32 0.0, %v496
        %498 = vdwg.mxu0
        %499 = vmatpush.msra.mxu0 0.0
        %500 = vmatpush.msra.mxu0 0.0
        %501 = vmatpush.msra.mxu0 0.0
        %502 = vmatpush.msra.mxu0 0.0
        %503 = vmatpush.msra.mxu0 0.0
        %504 = vmatpush.msra.mxu0 0.0
        %505 = vmatpush.msra.mxu0 0.0
        %506 = vmatpush.msra.mxu0 0.0
        %507 = vmatpush.msra.mxu0 %v421
        %508 = vmatpush.msra.mxu0 %v417
        %509 = vmatpush.msra.mxu0 %v413
        %510 = vmatpush.msra.mxu0 %v409
        %511 = vmatpush.msra.mxu0 %v405
        %512 = vmatpush.msra.mxu0 %v401
        %513 = vmatpush.msra.mxu0 %v397
        %514 = vmatpush.msra.mxu0 %v393
        %515 = vmatmul.f32.gmra.mxu0 %v437
        %v516 = vpop.f32.mrf.mxu0
        %v517 = vadd.f32 %v497, %v516
        %518 = vdwg.mxu0
        %519 = vmatpush.msra.mxu0 %v390
        %520 = vmatpush.msra.mxu0 %v386
        %521 = vmatpush.msra.mxu0 %v382
        %522 = vmatpush.msra.mxu0 %v378
        %523 = vmatpush.msra.mxu0 %v374
        %524 = vmatpush.msra.mxu0 %v370
        %525 = vmatpush.msra.mxu0 %v366
        %526 = vmatpush.msra.mxu0 %v362
        %527 = vmatpush.msra.mxu0 %v358
        %528 = vmatpush.msra.mxu0 %v354
        %529 = vmatpush.msra.mxu0 %v350
        %530 = vmatpush.msra.mxu0 %v346
        %531 = vmatpush.msra.mxu0 %v342
        %532 = vmatpush.msra.mxu0 %v338
        %533 = vmatpush.msra.mxu0 %v334
        %534 = vmatpush.msra.mxu0 %v330
        %535 = vmatmul.f32.gmra.mxu0 %v431
        %v536 = vpop.f32.mrf.mxu0
        %v537 = vadd.f32 0.0, %v536
        %538 = vdwg.mxu0
        %539 = vmatpush.msra.mxu0 0.0
        %540 = vmatpush.msra.mxu0 0.0
        %541 = vmatpush.msra.mxu0 0.0
        %542 = vmatpush.msra.mxu0 0.0
        %543 = vmatpush.msra.mxu0 0.0
        %544 = vmatpush.msra.mxu0 0.0
        %545 = vmatpush.msra.mxu0 0.0
        %546 = vmatpush.msra.mxu0 0.0
        %547 = vmatpush.msra.mxu0 %v422
        %548 = vmatpush.msra.mxu0 %v418
        %549 = vmatpush.msra.mxu0 %v414
        %550 = vmatpush.msra.mxu0 %v410
        %551 = vmatpush.msra.mxu0 %v406
        %552 = vmatpush.msra.mxu0 %v402
        %553 = vmatpush.msra.mxu0 %v398
        %554 = vmatpush.msra.mxu0 %v394
        %555 = vmatmul.f32.gmra.mxu0 %v437
        %v556 = vpop.f32.mrf.mxu0
        %v557 = vadd.f32 %v537, %v556
        %558 = vdwg.mxu0
        %559 = vmatpush.msra.mxu0 %v391
        %560 = vmatpush.msra.mxu0 %v387
        %561 = vmatpush.msra.mxu0 %v383
        %562 = vmatpush.msra.mxu0 %v379
        %563 = vmatpush.msra.mxu0 %v375
        %564 = vmatpush.msra.mxu0 %v371
        %565 = vmatpush.msra.mxu0 %v367
        %566 = vmatpush.msra.mxu0 %v363
        %567 = vmatpush.msra.mxu0 %v359
        %568 = vmatpush.msra.mxu0 %v355
        %569 = vmatpush.msra.mxu0 %v351
        %570 = vmatpush.msra.mxu0 %v347
        %571 = vmatpush.msra.mxu0 %v343
        %572 = vmatpush.msra.mxu0 %v339
        %573 = vmatpush.msra.mxu0 %v335
        %574 = vmatpush.msra.mxu0 %v331
        %575 = vmatmul.f32.gmra.mxu0 %v431
        %v576 = vpop.f32.mrf.mxu0
        %v577 = vadd.f32 0.0, %v576
        %578 = vdwg.mxu0
        %579 = vmatpush.msra.mxu0 0.0
        %580 = vmatpush.msra.mxu0 0.0
        %581 = vmatpush.msra.mxu0 0.0
        %582 = vmatpush.msra.mxu0 0.0
        %583 = vmatpush.msra.mxu0 0.0
        %584 = vmatpush.msra.mxu0 0.0
        %585 = vmatpush.msra.mxu0 0.0
        %586 = vmatpush.msra.mxu0 0.0
        %587 = vmatpush.msra.mxu0 %v423
        %588 = vmatpush.msra.mxu0 %v419
        %589 = vmatpush.msra.mxu0 %v415
        %590 = vmatpush.msra.mxu0 %v411
        %591 = vmatpush.msra.mxu0 %v407
        %592 = vmatpush.msra.mxu0 %v403
        %593 = vmatpush.msra.mxu0 %v399
        %594 = vmatpush.msra.mxu0 %v395
        %595 = vmatmul.f32.gmra.mxu0 %v437
        %v596 = vpop.f32.mrf.mxu0
        %v597 = vadd.f32 %v577, %v596
        %598 = vdwg.mxu0
        %v600 = vsel %vm436, %v226, 0
        %602 = vmatpush.msra.mxu0 %v287
        %603 = vmatpush.msra.mxu0 %v283
        %604 = vmatpush.msra.mxu0 %v279
        %605 = vmatpush.msra.mxu0 %v275
        %606 = vmatpush.msra.mxu0 %v271
        %607 = vmatpush.msra.mxu0 %v267
        %608 = vmatpush.msra.mxu0 %v263
        %609 = vmatpush.msra.mxu0 %v259
        %610 = vmatpush.msra.mxu0 %v255
        %611 = vmatpush.msra.mxu0 %v251
        %612 = vmatpush.msra.mxu0 %v247
        %613 = vmatpush.msra.mxu0 %v243
        %614 = vmatpush.msra.mxu0 %v239
        %615 = vmatpush.msra.mxu0 %v235
        %616 = vmatpush.msra.mxu0 %v231
        %617 = vmatpush.msra.mxu0 %v227
        %618 = vmatmul.f32.gmra.mxu0 %v225
        %v619 = vpop.f32.mrf.mxu0
        %v620 = vadd.f32 %v477, %v619
        %621 = vdwg.mxu0
        %622 = vmatpush.msra.mxu0 0.0
        %623 = vmatpush.msra.mxu0 0.0
        %624 = vmatpush.msra.mxu0 0.0
        %625 = vmatpush.msra.mxu0 0.0
        %626 = vmatpush.msra.mxu0 0.0
        %627 = vmatpush.msra.mxu0 0.0
        %628 = vmatpush.msra.mxu0 0.0
        %629 = vmatpush.msra.mxu0 0.0
        %630 = vmatpush.msra.mxu0 %v319
        %631 = vmatpush.msra.mxu0 %v315
        %632 = vmatpush.msra.mxu0 %v311
        %633 = vmatpush.msra.mxu0 %v307
        %634 = vmatpush.msra.mxu0 %v303
        %635 = vmatpush.msra.mxu0 %v299
        %636 = vmatpush.msra.mxu0 %v295
        %637 = vmatpush.msra.mxu0 %v291
        %638 = vmatmul.f32.gmra.mxu0 %v600
        %v639 = vpop.f32.mrf.mxu0
        %v640 = vadd.f32 %v620, %v639
        %641 = vdwg.mxu0
        %642 = vmatpush.msra.mxu0 %v288
        %643 = vmatpush.msra.mxu0 %v284
        %644 = vmatpush.msra.mxu0 %v280
        %645 = vmatpush.msra.mxu0 %v276
        %646 = vmatpush.msra.mxu0 %v272
        %647 = vmatpush.msra.mxu0 %v268
        %648 = vmatpush.msra.mxu0 %v264
        %649 = vmatpush.msra.mxu0 %v260
        %650 = vmatpush.msra.mxu0 %v256
        %651 = vmatpush.msra.mxu0 %v252
        %652 = vmatpush.msra.mxu0 %v248
        %653 = vmatpush.msra.mxu0 %v244
        %654 = vmatpush.msra.mxu0 %v240
        %655 = vmatpush.msra.mxu0 %v236
        %656 = vmatpush.msra.mxu0 %v232
        %657 = vmatpush.msra.mxu0 %v228
        %658 = vmatmul.f32.gmra.mxu0 %v225
        %v659 = vpop.f32.mrf.mxu0
        %v660 = vadd.f32 %v517, %v659
        %661 = vdwg.mxu0
        %662 = vmatpush.msra.mxu0 0.0
        %663 = vmatpush.msra.mxu0 0.0
        %664 = vmatpush.msra.mxu0 0.0
        %665 = vmatpush.msra.mxu0 0.0
        %666 = vmatpush.msra.mxu0 0.0
        %667 = vmatpush.msra.mxu0 0.0
        %668 = vmatpush.msra.mxu0 0.0
        %669 = vmatpush.msra.mxu0 0.0
        %670 = vmatpush.msra.mxu0 %v320
        %671 = vmatpush.msra.mxu0 %v316
        %672 = vmatpush.msra.mxu0 %v312
        %673 = vmatpush.msra.mxu0 %v308
        %674 = vmatpush.msra.mxu0 %v304
        %675 = vmatpush.msra.mxu0 %v300
        %676 = vmatpush.msra.mxu0 %v296
        %677 = vmatpush.msra.mxu0 %v292
        %678 = vmatmul.f32.gmra.mxu0 %v600
        %v679 = vpop.f32.mrf.mxu0
        %v680 = vadd.f32 %v660, %v679
        %681 = vdwg.mxu0
        %682 = vmatpush.msra.mxu0 %v289
        %683 = vmatpush.msra.mxu0 %v285
        %684 = vmatpush.msra.mxu0 %v281
        %685 = vmatpush.msra.mxu0 %v277
        %686 = vmatpush.msra.mxu0 %v273
        %687 = vmatpush.msra.mxu0 %v269
        %688 = vmatpush.msra.mxu0 %v265
        %689 = vmatpush.msra.mxu0 %v261
        %690 = vmatpush.msra.mxu0 %v257
        %691 = vmatpush.msra.mxu0 %v253
        %692 = vmatpush.msra.mxu0 %v249
        %693 = vmatpush.msra.mxu0 %v245
        %694 = vmatpush.msra.mxu0 %v241
        %695 = vmatpush.msra.mxu0 %v237
        %696 = vmatpush.msra.mxu0 %v233
        %697 = vmatpush.msra.mxu0 %v229
        %698 = vmatmul.f32.gmra.mxu0 %v225
        %v699 = vpop.f32.mrf.mxu0
        %v700 = vadd.f32 %v557, %v699
        %701 = vdwg.mxu0
        %702 = vmatpush.msra.mxu0 0.0
        %703 = vmatpush.msra.mxu0 0.0
        %704 = vmatpush.msra.mxu0 0.0
        %705 = vmatpush.msra.mxu0 0.0
        %706 = vmatpush.msra.mxu0 0.0
        %707 = vmatpush.msra.mxu0 0.0
        %708 = vmatpush.msra.mxu0 0.0
        %709 = vmatpush.msra.mxu0 0.0
        %710 = vmatpush.msra.mxu0 %v321
        %711 = vmatpush.msra.mxu0 %v317
        %712 = vmatpush.msra.mxu0 %v313
        %713 = vmatpush.msra.mxu0 %v309
        %714 = vmatpush.msra.mxu0 %v305
        %715 = vmatpush.msra.mxu0 %v301
        %716 = vmatpush.msra.mxu0 %v297
        %717 = vmatpush.msra.mxu0 %v293
        %718 = vmatmul.f32.gmra.mxu0 %v600
        %v719 = vpop.f32.mrf.mxu0
        %v720 = vadd.f32 %v700, %v719
        %721 = vdwg.mxu0
        %722 = vmatpush.msra.mxu0 %v290
        %723 = vmatpush.msra.mxu0 %v286
        %724 = vmatpush.msra.mxu0 %v282
        %725 = vmatpush.msra.mxu0 %v278
        %726 = vmatpush.msra.mxu0 %v274
        %727 = vmatpush.msra.mxu0 %v270
        %728 = vmatpush.msra.mxu0 %v266
        %729 = vmatpush.msra.mxu0 %v262
        %730 = vmatpush.msra.mxu0 %v258
        %731 = vmatpush.msra.mxu0 %v254
        %732 = vmatpush.msra.mxu0 %v250
        %733 = vmatpush.msra.mxu0 %v246
        %734 = vmatpush.msra.mxu0 %v242
        %735 = vmatpush.msra.mxu0 %v238
        %736 = vmatpush.msra.mxu0 %v234
        %737 = vmatpush.msra.mxu0 %v230
        %738 = vmatmul.f32.gmra.mxu0 %v225
        %v739 = vpop.f32.mrf.mxu0
        %v740 = vadd.f32 %v597, %v739
        %741 = vdwg.mxu0
        %742 = vmatpush.msra.mxu0 0.0
        %743 = vmatpush.msra.mxu0 0.0
        %744 = vmatpush.msra.mxu0 0.0
        %745 = vmatpush.msra.mxu0 0.0
        %746 = vmatpush.msra.mxu0 0.0
        %747 = vmatpush.msra.mxu0 0.0
        %748 = vmatpush.msra.mxu0 0.0
        %749 = vmatpush.msra.mxu0 0.0
        %750 = vmatpush.msra.mxu0 %v322
        %751 = vmatpush.msra.mxu0 %v318
        %752 = vmatpush.msra.mxu0 %v314
        %753 = vmatpush.msra.mxu0 %v310
        %754 = vmatpush.msra.mxu0 %v306
        %755 = vmatpush.msra.mxu0 %v302
        %756 = vmatpush.msra.mxu0 %v298
        %757 = vmatpush.msra.mxu0 %v294
        %758 = vmatmul.f32.gmra.mxu0 %v600
        %v759 = vpop.f32.mrf.mxu0
        %v760 = vadd.f32 %v740, %v759
        %761 = vdwg.mxu0
        %v762 = vld [vmem:[%s224] sm:$0xfc]
        %v763 = vld [vmem:[%s224 + $0x8] sm:$0xfc]
        %v764 = vld [vmem:[%s224 + $0x10] sm:$0x3]
        %v765 = vld [vmem:[%s224 + $0x18] sm:$0x3]
        %s766 = scalar_lea.vmem [#allocation2], 1536
        %v767 = vld [vmem:[%s766] sm:$0xff]
        %v768 = vld [vmem:[%s766 + $0x8] sm:$0xff]
        %v769 = vld [vmem:[%s766 + $0x10] sm:$0xff]
        %v770 = vld [vmem:[%s766 + $0x18] sm:$0xff]
        %v771 = vld [vmem:[%s766 + $0x20] sm:$0xff]
        %v772 = vld [vmem:[%s766 + $0x28] sm:$0xff]
        %v773 = vld [vmem:[%s766 + $0x30] sm:$0xff]
        %v774 = vld [vmem:[%s766 + $0x38] sm:$0xff]
        %v775 = vld [vmem:[%s766 + $0x40] sm:$0xff]
        %v776 = vld [vmem:[%s766 + $0x48] sm:$0xff]
        %v777 = vld [vmem:[%s766 + $0x50] sm:$0xff]
        %v778 = vld [vmem:[%s766 + $0x58] sm:$0xff]
        %v779 = vld [vmem:[%s766 + $0x60] sm:$0xff]
        %v780 = vld [vmem:[%s766 + $0x68] sm:$0xff]
        %v781 = vld [vmem:[%s766 + $0x70] sm:$0xff]
        %v782 = vld [vmem:[%s766 + $0x78] sm:$0xff]
        %v783 = vld [vmem:[%s766 + $0x80] sm:$0xff]
        %v784 = vld [vmem:[%s766 + $0x88] sm:$0xff]
        %v785 = vld [vmem:[%s766 + $0x90] sm:$0xff]
        %v786 = vld [vmem:[%s766 + $0x98] sm:$0xff]
        %v787 = vld [vmem:[%s766 + $0xa0] sm:$0xff]
        %v788 = vld [vmem:[%s766 + $0xa8] sm:$0xff]
        %v789 = vld [vmem:[%s766 + $0xb0] sm:$0xff]
        %v790 = vld [vmem:[%s766 + $0xb8] sm:$0xff]
        %v791 = vld [vmem:[%s766 + $0xc0] sm:$0xff]
        %v792 = vld [vmem:[%s766 + $0xc8] sm:$0xff]
        %v793 = vld [vmem:[%s766 + $0xd0] sm:$0xff]
        %v794 = vld [vmem:[%s766 + $0xd8] sm:$0xff]
        %v795 = vld [vmem:[%s766 + $0xe0] sm:$0xff]
        %v796 = vld [vmem:[%s766 + $0xe8] sm:$0xff]
        %v797 = vld [vmem:[%s766 + $0xf0] sm:$0xff]
        %v798 = vld [vmem:[%s766 + $0xf8] sm:$0xff]
        %v799 = vld [vmem:[%s766 + $0x100] sm:$0xff]
        %v800 = vld [vmem:[%s766 + $0x108] sm:$0xff]
        %v801 = vld [vmem:[%s766 + $0x110] sm:$0xff]
        %v802 = vld [vmem:[%s766 + $0x118] sm:$0xff]
        %v803 = vld [vmem:[%s766 + $0x120] sm:$0xff]
        %v804 = vld [vmem:[%s766 + $0x128] sm:$0xff]
        %v805 = vld [vmem:[%s766 + $0x130] sm:$0xff]
        %v806 = vld [vmem:[%s766 + $0x138] sm:$0xff]
        %v807 = vld [vmem:[%s766 + $0x140] sm:$0xff]
        %v808 = vld [vmem:[%s766 + $0x148] sm:$0xff]
        %v809 = vld [vmem:[%s766 + $0x150] sm:$0xff]
        %v810 = vld [vmem:[%s766 + $0x158] sm:$0xff]
        %v811 = vld [vmem:[%s766 + $0x160] sm:$0xff]
        %v812 = vld [vmem:[%s766 + $0x168] sm:$0xff]
        %v813 = vld [vmem:[%s766 + $0x170] sm:$0xff]
        %v814 = vld [vmem:[%s766 + $0x178] sm:$0xff]
        %v815 = vld [vmem:[%s766 + $0x180] sm:$0xff]
        %v816 = vld [vmem:[%s766 + $0x188] sm:$0xff]
        %v817 = vld [vmem:[%s766 + $0x190] sm:$0xff]
        %v818 = vld [vmem:[%s766 + $0x198] sm:$0xff]
        %v819 = vld [vmem:[%s766 + $0x1a0] sm:$0xff]
        %v820 = vld [vmem:[%s766 + $0x1a8] sm:$0xff]
        %v821 = vld [vmem:[%s766 + $0x1b0] sm:$0xff]
        %v822 = vld [vmem:[%s766 + $0x1b8] sm:$0xff]
        %v823 = vld [vmem:[%s766 + $0x1c0] sm:$0xff]
        %v824 = vld [vmem:[%s766 + $0x1c8] sm:$0xff]
        %v825 = vld [vmem:[%s766 + $0x1d0] sm:$0xff]
        %v826 = vld [vmem:[%s766 + $0x1d8] sm:$0xff]
        %v827 = vld [vmem:[%s766 + $0x1e0] sm:$0xff]
        %v828 = vld [vmem:[%s766 + $0x1e8] sm:$0xff]
        %v829 = vld [vmem:[%s766 + $0x1f0] sm:$0xff]
        %v830 = vld [vmem:[%s766 + $0x1f8] sm:$0xff]
        %v831 = vld [vmem:[%s766 + $0x200] sm:$0xff]
        %v832 = vld [vmem:[%s766 + $0x208] sm:$0xff]
        %v833 = vld [vmem:[%s766 + $0x210] sm:$0xff]
        %v834 = vld [vmem:[%s766 + $0x218] sm:$0xff]
        %v835 = vld [vmem:[%s766 + $0x220] sm:$0xff]
        %v836 = vld [vmem:[%s766 + $0x228] sm:$0xff]
        %v837 = vld [vmem:[%s766 + $0x230] sm:$0xff]
        %v838 = vld [vmem:[%s766 + $0x238] sm:$0xff]
        %v839 = vld [vmem:[%s766 + $0x240] sm:$0xff]
        %v840 = vld [vmem:[%s766 + $0x248] sm:$0xff]
        %v841 = vld [vmem:[%s766 + $0x250] sm:$0xff]
        %v842 = vld [vmem:[%s766 + $0x258] sm:$0xff]
        %v843 = vld [vmem:[%s766 + $0x260] sm:$0xff]
        %v844 = vld [vmem:[%s766 + $0x268] sm:$0xff]
        %v845 = vld [vmem:[%s766 + $0x270] sm:$0xff]
        %v846 = vld [vmem:[%s766 + $0x278] sm:$0xff]
        %v847 = vld [vmem:[%s766 + $0x280] sm:$0xff]
        %v848 = vld [vmem:[%s766 + $0x288] sm:$0xff]
        %v849 = vld [vmem:[%s766 + $0x290] sm:$0xff]
        %v850 = vld [vmem:[%s766 + $0x298] sm:$0xff]
        %v851 = vld [vmem:[%s766 + $0x2a0] sm:$0xff]
        %v852 = vld [vmem:[%s766 + $0x2a8] sm:$0xff]
        %v853 = vld [vmem:[%s766 + $0x2b0] sm:$0xff]
        %v854 = vld [vmem:[%s766 + $0x2b8] sm:$0xff]
        %v855 = vld [vmem:[%s766 + $0x2c0] sm:$0xff]
        %v856 = vld [vmem:[%s766 + $0x2c8] sm:$0xff]
        %v857 = vld [vmem:[%s766 + $0x2d0] sm:$0xff]
        %v858 = vld [vmem:[%s766 + $0x2d8] sm:$0xff]
        %v859 = vld [vmem:[%s766 + $0x2e0] sm:$0xff]
        %v860 = vld [vmem:[%s766 + $0x2e8] sm:$0xff]
        %v861 = vld [vmem:[%s766 + $0x2f0] sm:$0xff]
        %v862 = vld [vmem:[%s766 + $0x2f8] sm:$0xff]
        %vm867 = vcmask 1045504
        %v868 = vrot.slane %v762, 2
        %v869 = vrot.slane %v764, 2
        %v870 = vsel %vm867, %v868, %v869
        %v871 = vrot.slane %v763, 2
        %v872 = vrot.slane %v765, 2
        %v873 = vsel %vm867, %v871, %v872
        %v875 = vsel %vm436, %v873, 0
        %877 = vmatpush.msra.mxu0 %v827
        %878 = vmatpush.msra.mxu0 %v823
        %879 = vmatpush.msra.mxu0 %v819
        %880 = vmatpush.msra.mxu0 %v815
        %881 = vmatpush.msra.mxu0 %v811
        %882 = vmatpush.msra.mxu0 %v807
        %883 = vmatpush.msra.mxu0 %v803
        %884 = vmatpush.msra.mxu0 %v799
        %885 = vmatpush.msra.mxu0 %v795
        %886 = vmatpush.msra.mxu0 %v791
        %887 = vmatpush.msra.mxu0 %v787
        %888 = vmatpush.msra.mxu0 %v783
        %889 = vmatpush.msra.mxu0 %v779
        %890 = vmatpush.msra.mxu0 %v775
        %891 = vmatpush.msra.mxu0 %v771
        %892 = vmatpush.msra.mxu0 %v767
        %893 = vmatmul.f32.gmra.mxu0 %v870
        %v894 = vpop.f32.mrf.mxu0
        %v895 = vadd.f32 0.0, %v894
        %896 = vdwg.mxu0
        %897 = vmatpush.msra.mxu0 0.0
        %898 = vmatpush.msra.mxu0 0.0
        %899 = vmatpush.msra.mxu0 0.0
        %900 = vmatpush.msra.mxu0 0.0
        %901 = vmatpush.msra.mxu0 0.0
        %902 = vmatpush.msra.mxu0 0.0
        %903 = vmatpush.msra.mxu0 0.0
        %904 = vmatpush.msra.mxu0 0.0
        %905 = vmatpush.msra.mxu0 %v859
        %906 = vmatpush.msra.mxu0 %v855
        %907 = vmatpush.msra.mxu0 %v851
        %908 = vmatpush.msra.mxu0 %v847
        %909 = vmatpush.msra.mxu0 %v843
        %910 = vmatpush.msra.mxu0 %v839
        %911 = vmatpush.msra.mxu0 %v835
        %912 = vmatpush.msra.mxu0 %v831
        %913 = vmatmul.f32.gmra.mxu0 %v875
        %v914 = vpop.f32.mrf.mxu0
        %v915 = vadd.f32 %v895, %v914
        %916 = vdwg.mxu0
        %917 = vmatpush.msra.mxu0 %v828
        %918 = vmatpush.msra.mxu0 %v824
        %919 = vmatpush.msra.mxu0 %v820
        %920 = vmatpush.msra.mxu0 %v816
        %921 = vmatpush.msra.mxu0 %v812
        %922 = vmatpush.msra.mxu0 %v808
        %923 = vmatpush.msra.mxu0 %v804
        %924 = vmatpush.msra.mxu0 %v800
        %925 = vmatpush.msra.mxu0 %v796
        %926 = vmatpush.msra.mxu0 %v792
        %927 = vmatpush.msra.mxu0 %v788
        %928 = vmatpush.msra.mxu0 %v784
        %929 = vmatpush.msra.mxu0 %v780
        %930 = vmatpush.msra.mxu0 %v776
        %931 = vmatpush.msra.mxu0 %v772
        %932 = vmatpush.msra.mxu0 %v768
        %933 = vmatmul.f32.gmra.mxu0 %v870
        %v934 = vpop.f32.mrf.mxu0
        %v935 = vadd.f32 0.0, %v934
        %936 = vdwg.mxu0
        %937 = vmatpush.msra.mxu0 0.0
        %938 = vmatpush.msra.mxu0 0.0
        %939 = vmatpush.msra.mxu0 0.0
        %940 = vmatpush.msra.mxu0 0.0
        %941 = vmatpush.msra.mxu0 0.0
        %942 = vmatpush.msra.mxu0 0.0
        %943 = vmatpush.msra.mxu0 0.0
        %944 = vmatpush.msra.mxu0 0.0
        %945 = vmatpush.msra.mxu0 %v860
        %946 = vmatpush.msra.mxu0 %v856
        %947 = vmatpush.msra.mxu0 %v852
        %948 = vmatpush.msra.mxu0 %v848
        %949 = vmatpush.msra.mxu0 %v844
        %950 = vmatpush.msra.mxu0 %v840
        %951 = vmatpush.msra.mxu0 %v836
        %952 = vmatpush.msra.mxu0 %v832
        %953 = vmatmul.f32.gmra.mxu0 %v875
        %v954 = vpop.f32.mrf.mxu0
        %v955 = vadd.f32 %v935, %v954
        %956 = vdwg.mxu0
        %957 = vmatpush.msra.mxu0 %v829
        %958 = vmatpush.msra.mxu0 %v825
        %959 = vmatpush.msra.mxu0 %v821
        %960 = vmatpush.msra.mxu0 %v817
        %961 = vmatpush.msra.mxu0 %v813
        %962 = vmatpush.msra.mxu0 %v809
        %963 = vmatpush.msra.mxu0 %v805
        %964 = vmatpush.msra.mxu0 %v801
        %965 = vmatpush.msra.mxu0 %v797
        %966 = vmatpush.msra.mxu0 %v793
        %967 = vmatpush.msra.mxu0 %v789
        %968 = vmatpush.msra.mxu0 %v785
        %969 = vmatpush.msra.mxu0 %v781
        %970 = vmatpush.msra.mxu0 %v777
        %971 = vmatpush.msra.mxu0 %v773
        %972 = vmatpush.msra.mxu0 %v769
        %973 = vmatmul.f32.gmra.mxu0 %v870
        %v974 = vpop.f32.mrf.mxu0
        %v975 = vadd.f32 0.0, %v974
        %976 = vdwg.mxu0
        %977 = vmatpush.msra.mxu0 0.0
        %978 = vmatpush.msra.mxu0 0.0
        %979 = vmatpush.msra.mxu0 0.0
        %980 = vmatpush.msra.mxu0 0.0
        %981 = vmatpush.msra.mxu0 0.0
        %982 = vmatpush.msra.mxu0 0.0
        %983 = vmatpush.msra.mxu0 0.0
        %984 = vmatpush.msra.mxu0 0.0
        %985 = vmatpush.msra.mxu0 %v861
        %986 = vmatpush.msra.mxu0 %v857
        %987 = vmatpush.msra.mxu0 %v853
        %988 = vmatpush.msra.mxu0 %v849
        %989 = vmatpush.msra.mxu0 %v845
        %990 = vmatpush.msra.mxu0 %v841
        %991 = vmatpush.msra.mxu0 %v837
        %992 = vmatpush.msra.mxu0 %v833
        %993 = vmatmul.f32.gmra.mxu0 %v875
        %v994 = vpop.f32.mrf.mxu0
        %v995 = vadd.f32 %v975, %v994
        %996 = vdwg.mxu0
        %997 = vmatpush.msra.mxu0 %v830
        %998 = vmatpush.msra.mxu0 %v826
        %999 = vmatpush.msra.mxu0 %v822
        %1000 = vmatpush.msra.mxu0 %v818
        %1001 = vmatpush.msra.mxu0 %v814
        %1002 = vmatpush.msra.mxu0 %v810
        %1003 = vmatpush.msra.mxu0 %v806
        %1004 = vmatpush.msra.mxu0 %v802
        %1005 = vmatpush.msra.mxu0 %v798
        %1006 = vmatpush.msra.mxu0 %v794
        %1007 = vmatpush.msra.mxu0 %v790
        %1008 = vmatpush.msra.mxu0 %v786
        %1009 = vmatpush.msra.mxu0 %v782
        %1010 = vmatpush.msra.mxu0 %v778
        %1011 = vmatpush.msra.mxu0 %v774
        %1012 = vmatpush.msra.mxu0 %v770
        %1013 = vmatmul.f32.gmra.mxu0 %v870
        %v1014 = vpop.f32.mrf.mxu0
        %v1015 = vadd.f32 0.0, %v1014
        %1016 = vdwg.mxu0
        %1017 = vmatpush.msra.mxu0 0.0
        %1018 = vmatpush.msra.mxu0 0.0
        %1019 = vmatpush.msra.mxu0 0.0
        %1020 = vmatpush.msra.mxu0 0.0
        %1021 = vmatpush.msra.mxu0 0.0
        %1022 = vmatpush.msra.mxu0 0.0
        %1023 = vmatpush.msra.mxu0 0.0
        %1024 = vmatpush.msra.mxu0 0.0
        %1025 = vmatpush.msra.mxu0 %v862
        %1026 = vmatpush.msra.mxu0 %v858
        %1027 = vmatpush.msra.mxu0 %v854
        %1028 = vmatpush.msra.mxu0 %v850
        %1029 = vmatpush.msra.mxu0 %v846
        %1030 = vmatpush.msra.mxu0 %v842
        %1031 = vmatpush.msra.mxu0 %v838
        %1032 = vmatpush.msra.mxu0 %v834
        %1033 = vmatmul.f32.gmra.mxu0 %v875
        %v1034 = vpop.f32.mrf.mxu0
        %v1035 = vadd.f32 %v1015, %v1034
        %1036 = vdwg.mxu0
        %v1037 = vadd.f32 %v640, %v915
        %v1038 = vadd.f32 %v680, %v955
        %v1039 = vadd.f32 %v720, %v995
        %v1040 = vadd.f32 %v760, %v1035
        %v1041 = vld [vmem:[%s224] sm:$0xf8]
        %v1042 = vld [vmem:[%s224 + $0x8] sm:$0xf8]
        %v1043 = vld [vmem:[%s224 + $0x10] sm:$0x7]
        %v1044 = vld [vmem:[%s224 + $0x18] sm:$0x7]
        %s1045 = scalar_lea.vmem [#allocation2], 2304
        %v1046 = vld [vmem:[%s1045] sm:$0xff]
        %v1047 = vld [vmem:[%s1045 + $0x8] sm:$0xff]
        %v1048 = vld [vmem:[%s1045 + $0x10] sm:$0xff]
        %v1049 = vld [vmem:[%s1045 + $0x18] sm:$0xff]
        %v1050 = vld [vmem:[%s1045 + $0x20] sm:$0xff]
        %v1051 = vld [vmem:[%s1045 + $0x28] sm:$0xff]
        %v1052 = vld [vmem:[%s1045 + $0x30] sm:$0xff]
        %v1053 = vld [vmem:[%s1045 + $0x38] sm:$0xff]
        %v1054 = vld [vmem:[%s1045 + $0x40] sm:$0xff]
        %v1055 = vld [vmem:[%s1045 + $0x48] sm:$0xff]
        %v1056 = vld [vmem:[%s1045 + $0x50] sm:$0xff]
        %v1057 = vld [vmem:[%s1045 + $0x58] sm:$0xff]
        %v1058 = vld [vmem:[%s1045 + $0x60] sm:$0xff]
        %v1059 = vld [vmem:[%s1045 + $0x68] sm:$0xff]
        %v1060 = vld [vmem:[%s1045 + $0x70] sm:$0xff]
        %v1061 = vld [vmem:[%s1045 + $0x78] sm:$0xff]
        %v1062 = vld [vmem:[%s1045 + $0x80] sm:$0xff]
        %v1063 = vld [vmem:[%s1045 + $0x88] sm:$0xff]
        %v1064 = vld [vmem:[%s1045 + $0x90] sm:$0xff]
        %v1065 = vld [vmem:[%s1045 + $0x98] sm:$0xff]
        %v1066 = vld [vmem:[%s1045 + $0xa0] sm:$0xff]
        %v1067 = vld [vmem:[%s1045 + $0xa8] sm:$0xff]
        %v1068 = vld [vmem:[%s1045 + $0xb0] sm:$0xff]
        %v1069 = vld [vmem:[%s1045 + $0xb8] sm:$0xff]
        %v1070 = vld [vmem:[%s1045 + $0xc0] sm:$0xff]
        %v1071 = vld [vmem:[%s1045 + $0xc8] sm:$0xff]
        %v1072 = vld [vmem:[%s1045 + $0xd0] sm:$0xff]
        %v1073 = vld [vmem:[%s1045 + $0xd8] sm:$0xff]
        %v1074 = vld [vmem:[%s1045 + $0xe0] sm:$0xff]
        %v1075 = vld [vmem:[%s1045 + $0xe8] sm:$0xff]
        %v1076 = vld [vmem:[%s1045 + $0xf0] sm:$0xff]
        %v1077 = vld [vmem:[%s1045 + $0xf8] sm:$0xff]
        %v1078 = vld [vmem:[%s1045 + $0x100] sm:$0xff]
        %v1079 = vld [vmem:[%s1045 + $0x108] sm:$0xff]
        %v1080 = vld [vmem:[%s1045 + $0x110] sm:$0xff]
        %v1081 = vld [vmem:[%s1045 + $0x118] sm:$0xff]
        %v1082 = vld [vmem:[%s1045 + $0x120] sm:$0xff]
        %v1083 = vld [vmem:[%s1045 + $0x128] sm:$0xff]
        %v1084 = vld [vmem:[%s1045 + $0x130] sm:$0xff]
        %v1085 = vld [vmem:[%s1045 + $0x138] sm:$0xff]
        %v1086 = vld [vmem:[%s1045 + $0x140] sm:$0xff]
        %v1087 = vld [vmem:[%s1045 + $0x148] sm:$0xff]
        %v1088 = vld [vmem:[%s1045 + $0x150] sm:$0xff]
        %v1089 = vld [vmem:[%s1045 + $0x158] sm:$0xff]
        %v1090 = vld [vmem:[%s1045 + $0x160] sm:$0xff]
        %v1091 = vld [vmem:[%s1045 + $0x168] sm:$0xff]
        %v1092 = vld [vmem:[%s1045 + $0x170] sm:$0xff]
        %v1093 = vld [vmem:[%s1045 + $0x178] sm:$0xff]
        %v1094 = vld [vmem:[%s1045 + $0x180] sm:$0xff]
        %v1095 = vld [vmem:[%s1045 + $0x188] sm:$0xff]
        %v1096 = vld [vmem:[%s1045 + $0x190] sm:$0xff]
        %v1097 = vld [vmem:[%s1045 + $0x198] sm:$0xff]
        %v1098 = vld [vmem:[%s1045 + $0x1a0] sm:$0xff]
        %v1099 = vld [vmem:[%s1045 + $0x1a8] sm:$0xff]
        %v1100 = vld [vmem:[%s1045 + $0x1b0] sm:$0xff]
        %v1101 = vld [vmem:[%s1045 + $0x1b8] sm:$0xff]
        %v1102 = vld [vmem:[%s1045 + $0x1c0] sm:$0xff]
        %v1103 = vld [vmem:[%s1045 + $0x1c8] sm:$0xff]
        %v1104 = vld [vmem:[%s1045 + $0x1d0] sm:$0xff]
        %v1105 = vld [vmem:[%s1045 + $0x1d8] sm:$0xff]
        %v1106 = vld [vmem:[%s1045 + $0x1e0] sm:$0xff]
        %v1107 = vld [vmem:[%s1045 + $0x1e8] sm:$0xff]
        %v1108 = vld [vmem:[%s1045 + $0x1f0] sm:$0xff]
        %v1109 = vld [vmem:[%s1045 + $0x1f8] sm:$0xff]
        %v1110 = vld [vmem:[%s1045 + $0x200] sm:$0xff]
        %v1111 = vld [vmem:[%s1045 + $0x208] sm:$0xff]
        %v1112 = vld [vmem:[%s1045 + $0x210] sm:$0xff]
        %v1113 = vld [vmem:[%s1045 + $0x218] sm:$0xff]
        %v1114 = vld [vmem:[%s1045 + $0x220] sm:$0xff]
        %v1115 = vld [vmem:[%s1045 + $0x228] sm:$0xff]
        %v1116 = vld [vmem:[%s1045 + $0x230] sm:$0xff]
        %v1117 = vld [vmem:[%s1045 + $0x238] sm:$0xff]
        %v1118 = vld [vmem:[%s1045 + $0x240] sm:$0xff]
        %v1119 = vld [vmem:[%s1045 + $0x248] sm:$0xff]
        %v1120 = vld [vmem:[%s1045 + $0x250] sm:$0xff]
        %v1121 = vld [vmem:[%s1045 + $0x258] sm:$0xff]
        %v1122 = vld [vmem:[%s1045 + $0x260] sm:$0xff]
        %v1123 = vld [vmem:[%s1045 + $0x268] sm:$0xff]
        %v1124 = vld [vmem:[%s1045 + $0x270] sm:$0xff]
        %v1125 = vld [vmem:[%s1045 + $0x278] sm:$0xff]
        %v1126 = vld [vmem:[%s1045 + $0x280] sm:$0xff]
        %v1127 = vld [vmem:[%s1045 + $0x288] sm:$0xff]
        %v1128 = vld [vmem:[%s1045 + $0x290] sm:$0xff]
        %v1129 = vld [vmem:[%s1045 + $0x298] sm:$0xff]
        %v1130 = vld [vmem:[%s1045 + $0x2a0] sm:$0xff]
        %v1131 = vld [vmem:[%s1045 + $0x2a8] sm:$0xff]
        %v1132 = vld [vmem:[%s1045 + $0x2b0] sm:$0xff]
        %v1133 = vld [vmem:[%s1045 + $0x2b8] sm:$0xff]
        %v1134 = vld [vmem:[%s1045 + $0x2c0] sm:$0xff]
        %v1135 = vld [vmem:[%s1045 + $0x2c8] sm:$0xff]
        %v1136 = vld [vmem:[%s1045 + $0x2d0] sm:$0xff]
        %v1137 = vld [vmem:[%s1045 + $0x2d8] sm:$0xff]
        %v1138 = vld [vmem:[%s1045 + $0x2e0] sm:$0xff]
        %v1139 = vld [vmem:[%s1045 + $0x2e8] sm:$0xff]
        %v1140 = vld [vmem:[%s1045 + $0x2f0] sm:$0xff]
        %v1141 = vld [vmem:[%s1045 + $0x2f8] sm:$0xff]
        %vm1146 = vcmask 1044480
        %v1147 = vrot.slane %v1041, 3
        %v1148 = vrot.slane %v1043, 3
        %v1149 = vsel %vm1146, %v1147, %v1148
        %v1150 = vrot.slane %v1042, 3
        %v1151 = vrot.slane %v1044, 3
        %v1152 = vsel %vm1146, %v1150, %v1151
        %v1154 = vsel %vm436, %v1152, 0
        %1156 = vmatpush.msra.mxu0 %v1106
        %1157 = vmatpush.msra.mxu0 %v1102
        %1158 = vmatpush.msra.mxu0 %v1098
        %1159 = vmatpush.msra.mxu0 %v1094
        %1160 = vmatpush.msra.mxu0 %v1090
        %1161 = vmatpush.msra.mxu0 %v1086
        %1162 = vmatpush.msra.mxu0 %v1082
        %1163 = vmatpush.msra.mxu0 %v1078
        %1164 = vmatpush.msra.mxu0 %v1074
        %1165 = vmatpush.msra.mxu0 %v1070
        %1166 = vmatpush.msra.mxu0 %v1066
        %1167 = vmatpush.msra.mxu0 %v1062
        %1168 = vmatpush.msra.mxu0 %v1058
        %1169 = vmatpush.msra.mxu0 %v1054
        %1170 = vmatpush.msra.mxu0 %v1050
        %1171 = vmatpush.msra.mxu0 %v1046
        %1172 = vmatmul.f32.gmra.mxu0 %v1149
        %v1173 = vpop.f32.mrf.mxu0
        %v1174 = vadd.f32 0.0, %v1173
        %1175 = vdwg.mxu0
        %1176 = vmatpush.msra.mxu0 0.0
        %1177 = vmatpush.msra.mxu0 0.0
        %1178 = vmatpush.msra.mxu0 0.0
        %1179 = vmatpush.msra.mxu0 0.0
        %1180 = vmatpush.msra.mxu0 0.0
        %1181 = vmatpush.msra.mxu0 0.0
        %1182 = vmatpush.msra.mxu0 0.0
        %1183 = vmatpush.msra.mxu0 0.0
        %1184 = vmatpush.msra.mxu0 %v1138
        %1185 = vmatpush.msra.mxu0 %v1134
        %1186 = vmatpush.msra.mxu0 %v1130
        %1187 = vmatpush.msra.mxu0 %v1126
        %1188 = vmatpush.msra.mxu0 %v1122
        %1189 = vmatpush.msra.mxu0 %v1118
        %1190 = vmatpush.msra.mxu0 %v1114
        %1191 = vmatpush.msra.mxu0 %v1110
        %1192 = vmatmul.f32.gmra.mxu0 %v1154
        %v1193 = vpop.f32.mrf.mxu0
        %v1194 = vadd.f32 %v1174, %v1193
        %1195 = vdwg.mxu0
        %1196 = vmatpush.msra.mxu0 %v1107
        %1197 = vmatpush.msra.mxu0 %v1103
        %1198 = vmatpush.msra.mxu0 %v1099
        %1199 = vmatpush.msra.mxu0 %v1095
        %1200 = vmatpush.msra.mxu0 %v1091
        %1201 = vmatpush.msra.mxu0 %v1087
        %1202 = vmatpush.msra.mxu0 %v1083
        %1203 = vmatpush.msra.mxu0 %v1079
        %1204 = vmatpush.msra.mxu0 %v1075
        %1205 = vmatpush.msra.mxu0 %v1071
        %1206 = vmatpush.msra.mxu0 %v1067
        %1207 = vmatpush.msra.mxu0 %v1063
        %1208 = vmatpush.msra.mxu0 %v1059
        %1209 = vmatpush.msra.mxu0 %v1055
        %1210 = vmatpush.msra.mxu0 %v1051
        %1211 = vmatpush.msra.mxu0 %v1047
        %1212 = vmatmul.f32.gmra.mxu0 %v1149
        %v1213 = vpop.f32.mrf.mxu0
        %v1214 = vadd.f32 0.0, %v1213
        %1215 = vdwg.mxu0
        %1216 = vmatpush.msra.mxu0 0.0
        %1217 = vmatpush.msra.mxu0 0.0
        %1218 = vmatpush.msra.mxu0 0.0
        %1219 = vmatpush.msra.mxu0 0.0
        %1220 = vmatpush.msra.mxu0 0.0
        %1221 = vmatpush.msra.mxu0 0.0
        %1222 = vmatpush.msra.mxu0 0.0
        %1223 = vmatpush.msra.mxu0 0.0
        %1224 = vmatpush.msra.mxu0 %v1139
        %1225 = vmatpush.msra.mxu0 %v1135
        %1226 = vmatpush.msra.mxu0 %v1131
        %1227 = vmatpush.msra.mxu0 %v1127
        %1228 = vmatpush.msra.mxu0 %v1123
        %1229 = vmatpush.msra.mxu0 %v1119
        %1230 = vmatpush.msra.mxu0 %v1115
        %1231 = vmatpush.msra.mxu0 %v1111
        %1232 = vmatmul.f32.gmra.mxu0 %v1154
        %v1233 = vpop.f32.mrf.mxu0
        %v1234 = vadd.f32 %v1214, %v1233
        %1235 = vdwg.mxu0
        %1236 = vmatpush.msra.mxu0 %v1108
        %1237 = vmatpush.msra.mxu0 %v1104
        %1238 = vmatpush.msra.mxu0 %v1100
        %1239 = vmatpush.msra.mxu0 %v1096
        %1240 = vmatpush.msra.mxu0 %v1092
        %1241 = vmatpush.msra.mxu0 %v1088
        %1242 = vmatpush.msra.mxu0 %v1084
        %1243 = vmatpush.msra.mxu0 %v1080
        %1244 = vmatpush.msra.mxu0 %v1076
        %1245 = vmatpush.msra.mxu0 %v1072
        %1246 = vmatpush.msra.mxu0 %v1068
        %1247 = vmatpush.msra.mxu0 %v1064
        %1248 = vmatpush.msra.mxu0 %v1060
        %1249 = vmatpush.msra.mxu0 %v1056
        %1250 = vmatpush.msra.mxu0 %v1052
        %1251 = vmatpush.msra.mxu0 %v1048
        %1252 = vmatmul.f32.gmra.mxu0 %v1149
        %v1253 = vpop.f32.mrf.mxu0
        %v1254 = vadd.f32 0.0, %v1253
        %1255 = vdwg.mxu0
        %1256 = vmatpush.msra.mxu0 0.0
        %1257 = vmatpush.msra.mxu0 0.0
        %1258 = vmatpush.msra.mxu0 0.0
        %1259 = vmatpush.msra.mxu0 0.0
        %1260 = vmatpush.msra.mxu0 0.0
        %1261 = vmatpush.msra.mxu0 0.0
        %1262 = vmatpush.msra.mxu0 0.0
        %1263 = vmatpush.msra.mxu0 0.0
        %1264 = vmatpush.msra.mxu0 %v1140
        %1265 = vmatpush.msra.mxu0 %v1136
        %1266 = vmatpush.msra.mxu0 %v1132
        %1267 = vmatpush.msra.mxu0 %v1128
        %1268 = vmatpush.msra.mxu0 %v1124
        %1269 = vmatpush.msra.mxu0 %v1120
        %1270 = vmatpush.msra.mxu0 %v1116
        %1271 = vmatpush.msra.mxu0 %v1112
        %1272 = vmatmul.f32.gmra.mxu0 %v1154
        %v1273 = vpop.f32.mrf.mxu0
        %v1274 = vadd.f32 %v1254, %v1273
        %1275 = vdwg.mxu0
        %1276 = vmatpush.msra.mxu0 %v1109
        %1277 = vmatpush.msra.mxu0 %v1105
        %1278 = vmatpush.msra.mxu0 %v1101
        %1279 = vmatpush.msra.mxu0 %v1097
        %1280 = vmatpush.msra.mxu0 %v1093
        %1281 = vmatpush.msra.mxu0 %v1089
        %1282 = vmatpush.msra.mxu0 %v1085
        %1283 = vmatpush.msra.mxu0 %v1081
        %1284 = vmatpush.msra.mxu0 %v1077
        %1285 = vmatpush.msra.mxu0 %v1073
        %1286 = vmatpush.msra.mxu0 %v1069
        %1287 = vmatpush.msra.mxu0 %v1065
        %1288 = vmatpush.msra.mxu0 %v1061
        %1289 = vmatpush.msra.mxu0 %v1057
        %1290 = vmatpush.msra.mxu0 %v1053
        %1291 = vmatpush.msra.mxu0 %v1049
        %1292 = vmatmul.f32.gmra.mxu0 %v1149
        %v1293 = vpop.f32.mrf.mxu0
        %v1294 = vadd.f32 0.0, %v1293
        %1295 = vdwg.mxu0
        %1296 = vmatpush.msra.mxu0 0.0
        %1297 = vmatpush.msra.mxu0 0.0
        %1298 = vmatpush.msra.mxu0 0.0
        %1299 = vmatpush.msra.mxu0 0.0
        %1300 = vmatpush.msra.mxu0 0.0
        %1301 = vmatpush.msra.mxu0 0.0
        %1302 = vmatpush.msra.mxu0 0.0
        %1303 = vmatpush.msra.mxu0 0.0
        %1304 = vmatpush.msra.mxu0 %v1141
        %1305 = vmatpush.msra.mxu0 %v1137
        %1306 = vmatpush.msra.mxu0 %v1133
        %1307 = vmatpush.msra.mxu0 %v1129
        %1308 = vmatpush.msra.mxu0 %v1125
        %1309 = vmatpush.msra.mxu0 %v1121
        %1310 = vmatpush.msra.mxu0 %v1117
        %1311 = vmatpush.msra.mxu0 %v1113
        %1312 = vmatmul.f32.gmra.mxu0 %v1154
        %v1313 = vpop.f32.mrf.mxu0
        %v1314 = vadd.f32 %v1294, %v1313
        %1315 = vdwg.mxu0
        %v1316 = vadd.f32 %v1037, %v1194
        %v1317 = vadd.f32 %v1038, %v1234
        %v1318 = vadd.f32 %v1039, %v1274
        %v1319 = vadd.f32 %v1040, %v1314
        %v1320 = vld [vmem:[%s224] sm:$0xf0]
        %v1321 = vld [vmem:[%s224 + $0x8] sm:$0xf0]
        %v1322 = vld [vmem:[%s224 + $0x10] sm:$0xf]
        %v1323 = vld [vmem:[%s224 + $0x18] sm:$0xf]
        %s1324 = scalar_lea.vmem [#allocation2], 3072
        %v1325 = vld [vmem:[%s1324] sm:$0xff]
        %v1326 = vld [vmem:[%s1324 + $0x8] sm:$0xff]
        %v1327 = vld [vmem:[%s1324 + $0x10] sm:$0xff]
        %v1328 = vld [vmem:[%s1324 + $0x18] sm:$0xff]
        %v1329 = vld [vmem:[%s1324 + $0x20] sm:$0xff]
        %v1330 = vld [vmem:[%s1324 + $0x28] sm:$0xff]
        %v1331 = vld [vmem:[%s1324 + $0x30] sm:$0xff]
        %v1332 = vld [vmem:[%s1324 + $0x38] sm:$0xff]
        %v1333 = vld [vmem:[%s1324 + $0x40] sm:$0xff]
        %v1334 = vld [vmem:[%s1324 + $0x48] sm:$0xff]
        %v1335 = vld [vmem:[%s1324 + $0x50] sm:$0xff]
        %v1336 = vld [vmem:[%s1324 + $0x58] sm:$0xff]
        %v1337 = vld [vmem:[%s1324 + $0x60] sm:$0xff]
        %v1338 = vld [vmem:[%s1324 + $0x68] sm:$0xff]
        %v1339 = vld [vmem:[%s1324 + $0x70] sm:$0xff]
        %v1340 = vld [vmem:[%s1324 + $0x78] sm:$0xff]
        %v1341 = vld [vmem:[%s1324 + $0x80] sm:$0xff]
        %v1342 = vld [vmem:[%s1324 + $0x88] sm:$0xff]
        %v1343 = vld [vmem:[%s1324 + $0x90] sm:$0xff]
        %v1344 = vld [vmem:[%s1324 + $0x98] sm:$0xff]
        %v1345 = vld [vmem:[%s1324 + $0xa0] sm:$0xff]
        %v1346 = vld [vmem:[%s1324 + $0xa8] sm:$0xff]
        %v1347 = vld [vmem:[%s1324 + $0xb0] sm:$0xff]
        %v1348 = vld [vmem:[%s1324 + $0xb8] sm:$0xff]
        %v1349 = vld [vmem:[%s1324 + $0xc0] sm:$0xff]
        %v1350 = vld [vmem:[%s1324 + $0xc8] sm:$0xff]
        %v1351 = vld [vmem:[%s1324 + $0xd0] sm:$0xff]
        %v1352 = vld [vmem:[%s1324 + $0xd8] sm:$0xff]
        %v1353 = vld [vmem:[%s1324 + $0xe0] sm:$0xff]
        %v1354 = vld [vmem:[%s1324 + $0xe8] sm:$0xff]
        %v1355 = vld [vmem:[%s1324 + $0xf0] sm:$0xff]
        %v1356 = vld [vmem:[%s1324 + $0xf8] sm:$0xff]
        %v1357 = vld [vmem:[%s1324 + $0x100] sm:$0xff]
        %v1358 = vld [vmem:[%s1324 + $0x108] sm:$0xff]
        %v1359 = vld [vmem:[%s1324 + $0x110] sm:$0xff]
        %v1360 = vld [vmem:[%s1324 + $0x118] sm:$0xff]
        %v1361 = vld [vmem:[%s1324 + $0x120] sm:$0xff]
        %v1362 = vld [vmem:[%s1324 + $0x128] sm:$0xff]
        %v1363 = vld [vmem:[%s1324 + $0x130] sm:$0xff]
        %v1364 = vld [vmem:[%s1324 + $0x138] sm:$0xff]
        %v1365 = vld [vmem:[%s1324 + $0x140] sm:$0xff]
        %v1366 = vld [vmem:[%s1324 + $0x148] sm:$0xff]
        %v1367 = vld [vmem:[%s1324 + $0x150] sm:$0xff]
        %v1368 = vld [vmem:[%s1324 + $0x158] sm:$0xff]
        %v1369 = vld [vmem:[%s1324 + $0x160] sm:$0xff]
        %v1370 = vld [vmem:[%s1324 + $0x168] sm:$0xff]
        %v1371 = vld [vmem:[%s1324 + $0x170] sm:$0xff]
        %v1372 = vld [vmem:[%s1324 + $0x178] sm:$0xff]
        %v1373 = vld [vmem:[%s1324 + $0x180] sm:$0xff]
        %v1374 = vld [vmem:[%s1324 + $0x188] sm:$0xff]
        %v1375 = vld [vmem:[%s1324 + $0x190] sm:$0xff]
        %v1376 = vld [vmem:[%s1324 + $0x198] sm:$0xff]
        %v1377 = vld [vmem:[%s1324 + $0x1a0] sm:$0xff]
        %v1378 = vld [vmem:[%s1324 + $0x1a8] sm:$0xff]
        %v1379 = vld [vmem:[%s1324 + $0x1b0] sm:$0xff]
        %v1380 = vld [vmem:[%s1324 + $0x1b8] sm:$0xff]
        %v1381 = vld [vmem:[%s1324 + $0x1c0] sm:$0xff]
        %v1382 = vld [vmem:[%s1324 + $0x1c8] sm:$0xff]
        %v1383 = vld [vmem:[%s1324 + $0x1d0] sm:$0xff]
        %v1384 = vld [vmem:[%s1324 + $0x1d8] sm:$0xff]
        %v1385 = vld [vmem:[%s1324 + $0x1e0] sm:$0xff]
        %v1386 = vld [vmem:[%s1324 + $0x1e8] sm:$0xff]
        %v1387 = vld [vmem:[%s1324 + $0x1f0] sm:$0xff]
        %v1388 = vld [vmem:[%s1324 + $0x1f8] sm:$0xff]
        %v1389 = vld [vmem:[%s1324 + $0x200] sm:$0xff]
        %v1390 = vld [vmem:[%s1324 + $0x208] sm:$0xff]
        %v1391 = vld [vmem:[%s1324 + $0x210] sm:$0xff]
        %v1392 = vld [vmem:[%s1324 + $0x218] sm:$0xff]
        %v1393 = vld [vmem:[%s1324 + $0x220] sm:$0xff]
        %v1394 = vld [vmem:[%s1324 + $0x228] sm:$0xff]
        %v1395 = vld [vmem:[%s1324 + $0x230] sm:$0xff]
        %v1396 = vld [vmem:[%s1324 + $0x238] sm:$0xff]
        %v1397 = vld [vmem:[%s1324 + $0x240] sm:$0xff]
        %v1398 = vld [vmem:[%s1324 + $0x248] sm:$0xff]
        %v1399 = vld [vmem:[%s1324 + $0x250] sm:$0xff]
        %v1400 = vld [vmem:[%s1324 + $0x258] sm:$0xff]
        %v1401 = vld [vmem:[%s1324 + $0x260] sm:$0xff]
        %v1402 = vld [vmem:[%s1324 + $0x268] sm:$0xff]
        %v1403 = vld [vmem:[%s1324 + $0x270] sm:$0xff]
        %v1404 = vld [vmem:[%s1324 + $0x278] sm:$0xff]
        %v1405 = vld [vmem:[%s1324 + $0x280] sm:$0xff]
        %v1406 = vld [vmem:[%s1324 + $0x288] sm:$0xff]
        %v1407 = vld [vmem:[%s1324 + $0x290] sm:$0xff]
        %v1408 = vld [vmem:[%s1324 + $0x298] sm:$0xff]
        %v1409 = vld [vmem:[%s1324 + $0x2a0] sm:$0xff]
        %v1410 = vld [vmem:[%s1324 + $0x2a8] sm:$0xff]
        %v1411 = vld [vmem:[%s1324 + $0x2b0] sm:$0xff]
        %v1412 = vld [vmem:[%s1324 + $0x2b8] sm:$0xff]
        %v1413 = vld [vmem:[%s1324 + $0x2c0] sm:$0xff]
        %v1414 = vld [vmem:[%s1324 + $0x2c8] sm:$0xff]
        %v1415 = vld [vmem:[%s1324 + $0x2d0] sm:$0xff]
        %v1416 = vld [vmem:[%s1324 + $0x2d8] sm:$0xff]
        %v1417 = vld [vmem:[%s1324 + $0x2e0] sm:$0xff]
        %v1418 = vld [vmem:[%s1324 + $0x2e8] sm:$0xff]
        %v1419 = vld [vmem:[%s1324 + $0x2f0] sm:$0xff]
        %v1420 = vld [vmem:[%s1324 + $0x2f8] sm:$0xff]
        %vm1425 = vcmask 1043456
        %v1426 = vrot.slane %v1320, 4
        %v1427 = vrot.slane %v1322, 4
        %v1428 = vsel %vm1425, %v1426, %v1427
        %v1429 = vrot.slane %v1321, 4
        %v1430 = vrot.slane %v1323, 4
        %v1431 = vsel %vm1425, %v1429, %v1430
        %v1433 = vsel %vm436, %v1431, 0
        %1435 = vmatpush.msra.mxu0 %v1385
        %1436 = vmatpush.msra.mxu0 %v1381
        %1437 = vmatpush.msra.mxu0 %v1377
        %1438 = vmatpush.msra.mxu0 %v1373
        %1439 = vmatpush.msra.mxu0 %v1369
        %1440 = vmatpush.msra.mxu0 %v1365
        %1441 = vmatpush.msra.mxu0 %v1361
        %1442 = vmatpush.msra.mxu0 %v1357
        %1443 = vmatpush.msra.mxu0 %v1353
        %1444 = vmatpush.msra.mxu0 %v1349
        %1445 = vmatpush.msra.mxu0 %v1345
        %1446 = vmatpush.msra.mxu0 %v1341
        %1447 = vmatpush.msra.mxu0 %v1337
        %1448 = vmatpush.msra.mxu0 %v1333
        %1449 = vmatpush.msra.mxu0 %v1329
        %1450 = vmatpush.msra.mxu0 %v1325
        %1451 = vmatmul.f32.gmra.mxu0 %v1428
        %v1452 = vpop.f32.mrf.mxu0
        %v1453 = vadd.f32 0.0, %v1452
        %1454 = vdwg.mxu0
        %1455 = vmatpush.msra.mxu0 0.0
        %1456 = vmatpush.msra.mxu0 0.0
        %1457 = vmatpush.msra.mxu0 0.0
        %1458 = vmatpush.msra.mxu0 0.0
        %1459 = vmatpush.msra.mxu0 0.0
        %1460 = vmatpush.msra.mxu0 0.0
        %1461 = vmatpush.msra.mxu0 0.0
        %1462 = vmatpush.msra.mxu0 0.0
        %1463 = vmatpush.msra.mxu0 %v1417
        %1464 = vmatpush.msra.mxu0 %v1413
        %1465 = vmatpush.msra.mxu0 %v1409
        %1466 = vmatpush.msra.mxu0 %v1405
        %1467 = vmatpush.msra.mxu0 %v1401
        %1468 = vmatpush.msra.mxu0 %v1397
        %1469 = vmatpush.msra.mxu0 %v1393
        %1470 = vmatpush.msra.mxu0 %v1389
        %1471 = vmatmul.f32.gmra.mxu0 %v1433
        %v1472 = vpop.f32.mrf.mxu0
        %v1473 = vadd.f32 %v1453, %v1472
        %1474 = vdwg.mxu0
        %1475 = vmatpush.msra.mxu0 %v1386
        %1476 = vmatpush.msra.mxu0 %v1382
        %1477 = vmatpush.msra.mxu0 %v1378
        %1478 = vmatpush.msra.mxu0 %v1374
        %1479 = vmatpush.msra.mxu0 %v1370
        %1480 = vmatpush.msra.mxu0 %v1366
        %1481 = vmatpush.msra.mxu0 %v1362
        %1482 = vmatpush.msra.mxu0 %v1358
        %1483 = vmatpush.msra.mxu0 %v1354
        %1484 = vmatpush.msra.mxu0 %v1350
        %1485 = vmatpush.msra.mxu0 %v1346
        %1486 = vmatpush.msra.mxu0 %v1342
        %1487 = vmatpush.msra.mxu0 %v1338
        %1488 = vmatpush.msra.mxu0 %v1334
        %1489 = vmatpush.msra.mxu0 %v1330
        %1490 = vmatpush.msra.mxu0 %v1326
        %1491 = vmatmul.f32.gmra.mxu0 %v1428
        %v1492 = vpop.f32.mrf.mxu0
        %v1493 = vadd.f32 0.0, %v1492
        %1494 = vdwg.mxu0
        %1495 = vmatpush.msra.mxu0 0.0
        %1496 = vmatpush.msra.mxu0 0.0
        %1497 = vmatpush.msra.mxu0 0.0
        %1498 = vmatpush.msra.mxu0 0.0
        %1499 = vmatpush.msra.mxu0 0.0
        %1500 = vmatpush.msra.mxu0 0.0
        %1501 = vmatpush.msra.mxu0 0.0
        %1502 = vmatpush.msra.mxu0 0.0
        %1503 = vmatpush.msra.mxu0 %v1418
        %1504 = vmatpush.msra.mxu0 %v1414
        %1505 = vmatpush.msra.mxu0 %v1410
        %1506 = vmatpush.msra.mxu0 %v1406
        %1507 = vmatpush.msra.mxu0 %v1402
        %1508 = vmatpush.msra.mxu0 %v1398
        %1509 = vmatpush.msra.mxu0 %v1394
        %1510 = vmatpush.msra.mxu0 %v1390
        %1511 = vmatmul.f32.gmra.mxu0 %v1433
        %v1512 = vpop.f32.mrf.mxu0
        %v1513 = vadd.f32 %v1493, %v1512
        %1514 = vdwg.mxu0
        %1515 = vmatpush.msra.mxu0 %v1387
        %1516 = vmatpush.msra.mxu0 %v1383
        %1517 = vmatpush.msra.mxu0 %v1379
        %1518 = vmatpush.msra.mxu0 %v1375
        %1519 = vmatpush.msra.mxu0 %v1371
        %1520 = vmatpush.msra.mxu0 %v1367
        %1521 = vmatpush.msra.mxu0 %v1363
        %1522 = vmatpush.msra.mxu0 %v1359
        %1523 = vmatpush.msra.mxu0 %v1355
        %1524 = vmatpush.msra.mxu0 %v1351
        %1525 = vmatpush.msra.mxu0 %v1347
        %1526 = vmatpush.msra.mxu0 %v1343
        %1527 = vmatpush.msra.mxu0 %v1339
        %1528 = vmatpush.msra.mxu0 %v1335
        %1529 = vmatpush.msra.mxu0 %v1331
        %1530 = vmatpush.msra.mxu0 %v1327
        %1531 = vmatmul.f32.gmra.mxu0 %v1428
        %v1532 = vpop.f32.mrf.mxu0
        %v1533 = vadd.f32 0.0, %v1532
        %1534 = vdwg.mxu0
        %1535 = vmatpush.msra.mxu0 0.0
        %1536 = vmatpush.msra.mxu0 0.0
        %1537 = vmatpush.msra.mxu0 0.0
        %1538 = vmatpush.msra.mxu0 0.0
        %1539 = vmatpush.msra.mxu0 0.0
        %1540 = vmatpush.msra.mxu0 0.0
        %1541 = vmatpush.msra.mxu0 0.0
        %1542 = vmatpush.msra.mxu0 0.0
        %1543 = vmatpush.msra.mxu0 %v1419
        %1544 = vmatpush.msra.mxu0 %v1415
        %1545 = vmatpush.msra.mxu0 %v1411
        %1546 = vmatpush.msra.mxu0 %v1407
        %1547 = vmatpush.msra.mxu0 %v1403
        %1548 = vmatpush.msra.mxu0 %v1399
        %1549 = vmatpush.msra.mxu0 %v1395
        %1550 = vmatpush.msra.mxu0 %v1391
        %1551 = vmatmul.f32.gmra.mxu0 %v1433
        %v1552 = vpop.f32.mrf.mxu0
        %v1553 = vadd.f32 %v1533, %v1552
        %1554 = vdwg.mxu0
        %1555 = vmatpush.msra.mxu0 %v1388
        %1556 = vmatpush.msra.mxu0 %v1384
        %1557 = vmatpush.msra.mxu0 %v1380
        %1558 = vmatpush.msra.mxu0 %v1376
        %1559 = vmatpush.msra.mxu0 %v1372
        %1560 = vmatpush.msra.mxu0 %v1368
        %1561 = vmatpush.msra.mxu0 %v1364
        %1562 = vmatpush.msra.mxu0 %v1360
        %1563 = vmatpush.msra.mxu0 %v1356
        %1564 = vmatpush.msra.mxu0 %v1352
        %1565 = vmatpush.msra.mxu0 %v1348
        %1566 = vmatpush.msra.mxu0 %v1344
        %1567 = vmatpush.msra.mxu0 %v1340
        %1568 = vmatpush.msra.mxu0 %v1336
        %1569 = vmatpush.msra.mxu0 %v1332
        %1570 = vmatpush.msra.mxu0 %v1328
        %1571 = vmatmul.f32.gmra.mxu0 %v1428
        %v1572 = vpop.f32.mrf.mxu0
        %v1573 = vadd.f32 0.0, %v1572
        %1574 = vdwg.mxu0
        %1575 = vmatpush.msra.mxu0 0.0
        %1576 = vmatpush.msra.mxu0 0.0
        %1577 = vmatpush.msra.mxu0 0.0
        %1578 = vmatpush.msra.mxu0 0.0
        %1579 = vmatpush.msra.mxu0 0.0
        %1580 = vmatpush.msra.mxu0 0.0
        %1581 = vmatpush.msra.mxu0 0.0
        %1582 = vmatpush.msra.mxu0 0.0
        %1583 = vmatpush.msra.mxu0 %v1420
        %1584 = vmatpush.msra.mxu0 %v1416
        %1585 = vmatpush.msra.mxu0 %v1412
        %1586 = vmatpush.msra.mxu0 %v1408
        %1587 = vmatpush.msra.mxu0 %v1404
        %1588 = vmatpush.msra.mxu0 %v1400
        %1589 = vmatpush.msra.mxu0 %v1396
        %1590 = vmatpush.msra.mxu0 %v1392
        %1591 = vmatmul.f32.gmra.mxu0 %v1433
        %v1592 = vpop.f32.mrf.mxu0
        %v1593 = vadd.f32 %v1573, %v1592
        %1594 = vdwg.mxu0
        %v1595 = vadd.f32 %v1316, %v1473
        %v1596 = vadd.f32 %v1317, %v1513
        %v1597 = vadd.f32 %v1318, %v1553
        %v1598 = vadd.f32 %v1319, %v1593
        %v1599 = vld [vmem:[%s191] sm:$0xf]
        %v1601 = vperm.slane %v1599, 0
        %v1602 = vperm.slane %v1599, 1
        %v1603 = vperm.slane %v1599, 2
        %v1604 = vperm.slane %v1599, 3
        %v1609 = vadd.f32 %v1595, %v1601
        %v1610 = vadd.f32 %v1596, %v1602
        %v1611 = vadd.f32 %v1597, %v1603
        %v1612 = vadd.f32 %v1598, %v1604
        %1613 = vst [vmem:[%s219] sm:$0xff] %v1609
        %1614 = vst [vmem:[%s219 + $0x8] sm:$0xff] %v1610
        %1615 = vst [vmem:[%s219 + $0x10] sm:$0xff] %v1611
        %1616 = vst [vmem:[%s219 + $0x18] sm:$0xff] %v1612
        %s1617 = sand.u32 %s102, 1
        %s1618 = scalar_lea.sflag [#allocation4], %s1617
        %s1619 = sand.u32 %s102, 1
        %s1620 = smul.addr %s1619, 32
        %s1621 = scalar_lea.vmem [#allocation7], %s1620
        // Predicated region
        $region41: #{tpu_custom_call.1} parent=31 // pred_check
          %p1622 = pneg %p112
        $region42: #{tpu_custom_call.1} parent=31 // pred_check_branch
          %1624 = sbr.rel (%p1622) target = $region44
        $region43: #{tpu_custom_call.1} parent=31 // pred_region
          %1626 = vsyncadd %s1618, 0
          %s1627 = smul.addr %s21, 4
          %s1628 = smul.addr %s1627, 8
          %s1629 = scalar_lea.hbm %s3, %s1628
          %s1631 = sshll.u32 %s1621, 4
          %s1632 = int_to_ptr.vmem [resolvable:$true] %s1631
          %s1633 = sshll.u32 %s1629, 4
          %s1634 = int_to_ptr.hbm [resolvable:$true] %s1633
          %1636 = dma.vmem_to_hbm [thread:$0]  %s1632, 512, %s1634, %s1618
        $region44: #{tpu_custom_call.1} parent=31 // pred_fallthru
          _
      $region32: #{tpu_custom_call.1} parent=5 // pred_fallthru
        _
      %p1637 = scmp.le.s32.totalorder 2, %s16
      // Predicated region
      $region45: #{tpu_custom_call.1} parent=5 // pred_check
        %p1638 = pneg %p1637
      $region46: #{tpu_custom_call.1} parent=5 // pred_check_branch
        %1640 = sbr.rel (%p1638) target = $region48
      $region47: #{tpu_custom_call.1} parent=5 // pred_region
        %s1641 = ssub.s32 %s16, 2
        // Predicated region
        $region49: #{tpu_custom_call.1} parent=47 // pred_check
          %p1642 = pneg %p118
        $region50: #{tpu_custom_call.1} parent=47 // pred_check_branch
          %1644 = sbr.rel (%p1642) target = $region52
        $region51: #{tpu_custom_call.1} parent=47 // pred_region
          %s1645 = sand.u32 %s103, 1
          %s1646 = scalar_lea.sflag [#allocation4], %s1645
          %s1647 = sand.u32 %s103, 1
          %s1648 = smul.addr %s1647, 32
          %s1649 = scalar_lea.vmem [#allocation7], %s1648
          %1651 = dma.done %s1646, 512
        $region52: #{tpu_custom_call.1} parent=47 // pred_fallthru
          _
      $region48: #{tpu_custom_call.1} parent=5 // pred_fallthru
        _
    $region6: #{tpu_custom_call.1} parent=1 // loop_footer
      %s20 = sadd.s32 1, %s16
    $region7: #{tpu_custom_call.1} parent=1 // loop_footer_branch
      %15 = sbr.rel target = $region3
    $region8: #{tpu_custom_call.1} parent=1 // loop_exit
      _
    %1652 = vsyncpa [#allocation3], 1
    %s1653 = scalar_lea.sflag [#allocation3], 1
    %1654 = vsyncpa %s1653, 1
    %1655 = vsyncpa [#allocation6], 1
    %s1656 = scalar_lea.sflag [#allocation6], 1
    %1657 = vsyncpa %s1656, 1
    %1658 = vsyncpa [#allocation4], 1
    %s1659 = scalar_lea.sflag [#allocation4], 1
    %1660 = vsyncpa %s1659, 1

</llo_original>
